<compile_context>
chip_gen: v6e
topology: v6e:2x2x1
jax: 0.10.0
libtpu: 0.0.40
codegen_flags: <defaults>
</compile_context>

<pallas_src>
import jax
import jax.numpy as jnp
from jax.experimental import pallas as pl
from jax.experimental.pallas import tpu as pltpu


# ---------------------------------------------------------------------------
# tile-size helpers
# ---------------------------------------------------------------------------
def _round_up(x, m):
    return ((x + m - 1) // m) * m


def _pick_tn(c_out):
    """C_out tile: full if small, else a lane-dense 128-multiple divisor."""
    if c_out <= 512:
        return c_out
    for t in (512, 256, 128):
        if c_out % t == 0:
            return t
    return c_out


def _pick_th(n, n_j, c, tn, h_out, w_out, qp, itemsize,
             m_target=1024, byte_budget=20 << 20):
    """Output-row tile along H_out: largest divisor of h_out whose per-step
    VMEM footprint (double-buffered blocks + resident weights + f32
    accumulators) fits the budget, preferring >= 4 total grid steps so both
    v7x TensorCores and the DMA pipeline stay busy."""
    w_bytes = 2 * 9 * c * tn * itemsize                      # w01 + w2, dbl-buf

    def est(th):
        body = 2 * (2 * th * qp * 2 * c) * itemsize          # a_ref, dbl-buf
        halo = 2 * (2 * qp * 2 * c) * itemsize               # b_ref, dbl-buf
        outb = 2 * (th * w_out * tn) * itemsize               # o_ref, dbl-buf
        accb = 2 * (th * qp * tn) * 4                         # acc0 + acc1
        return body + halo + outb + accb + w_bytes

    cands = [t for t in range(1, h_out + 1)
             if h_out % t == 0 and t * qp <= m_target and est(t) <= byte_budget]
    if not cands:
        cands = [1]
    good = [t for t in cands if n * n_j * (h_out // t) >= 4]
    return max(good) if good else max(cands)


# ---------------------------------------------------------------------------
# conv path: implicit-GEMM 3x3 stride-2 conv + bias
# ---------------------------------------------------------------------------
def _conv3x3s2_kernel(a_ref, b_ref, w01_ref, w2_ref, bias_ref, o_ref,
                      acc0_ref, acc1_ref):
    # a_ref   : (2, 1, th, Qp, 2C)  body rows; leading dim = kh parity (ah)
    # b_ref   : (2, 1, 1,  Qp, 2C)  one-row halo (P-row i*th + th)
    # w01_ref : (3, 2C, tn)         fused kw in {0,1} taps, per kh
    # w2_ref  : (3,  C, tn)         kw = 2 taps, per kh
    # bias_ref: (1, tn)
    # o_ref   : (1, th, W_out, tn)
    # acc0/1  : (th*Qp, tn) f32     dw=0 / dw=1 accumulators over full Qp
    th = a_ref.shape[2]
    qp = a_ref.shape[3]
    c2 = a_ref.shape[4]
    c = c2 // 2
    w_out = o_ref.shape[2]
    tn = o_ref.shape[3]
    m = th * qp
    mb = (th - 1) * qp
    f32 = jnp.float32

    bias = bias_ref[...].astype(f32)                     # (1, tn), broadcasts

    # dh = 0 taps (kh = 0 -> ah = 0, kh = 1 -> ah = 1): contiguous full-tile
    # GEMMs; the accumulator init (incl. bias) is fused into the first write,
    # so there is no zero-fill and no read-modify-write here.
    f0 = a_ref[0, 0]                                     # (th, Qp, 2C)
    f1 = a_ref[1, 0]
    f0f = f0.reshape(m, c2)                              # layout-trivial (Qp%8==0)
    f1f = f1.reshape(m, c2)
    acc0_ref[...] = (jnp.dot(f0f, w01_ref[0], preferred_element_type=f32)
                     + jnp.dot(f1f, w01_ref[1], preferred_element_type=f32)
                     + bias)
    acc1_ref[...] = (jnp.dot(f0f[:, :c], w2_ref[0], preferred_element_type=f32)
                     + jnp.dot(f1f[:, :c], w2_ref[1], preferred_element_type=f32))

    # dh = 1 tap (kh = 2, ah = 0): split into a (th-1)-row piece from the body
    # block and a 1-row piece from the halo block (no VMEM stitch buffer).
    if th > 1:
        fbf = f0[1:th].reshape(mb, c2)
        acc0_ref[0:mb, :] += jnp.dot(fbf, w01_ref[2], preferred_element_type=f32)
        acc1_ref[0:mb, :] += jnp.dot(fbf[:, :c], w2_ref[2],
                                     preferred_element_type=f32)
    fh = b_ref[0, 0, 0]                                  # (Qp, 2C)
    acc0_ref[mb:m, :] += jnp.dot(fh, w01_ref[2], preferred_element_type=f32)
    acc1_ref[mb:m, :] += jnp.dot(fh[:, :c], w2_ref[2], preferred_element_type=f32)

    # Combine: out[r, j] = acc0[r, j] + acc1[r, j + 1]   (dw = 1 column shift)
    y0 = acc0_ref[...].reshape(th, qp, tn)
    y1 = acc1_ref[...].reshape(th, qp, tn)
    o_ref[0] = (y0[:, 0:w_out, :] + y1[:, 1:1 + w_out, :]).astype(o_ref.dtype)


def _conv3x3_stride2_impl(x, weight, bias):
    n, c, h, w = x.shape
    assert h % 2 == 0 and w % 2 == 0, "Downsample conv path assumes even H, W"
    c_out = weight.shape[0]
    h_out, w_out = h // 2, w // 2
    p = h_out + 1
    q = w_out + 1
    qp = _round_up(q, 8)     # pad Q so in-kernel reshapes stay layout-trivial

    # Single space-to-depth pass over the zero-padded input, folding the kw
    # parity into channels: x2[a, n, pp, qq, b*C + cc] = x_pad[n, cc, 2pp+a, 2qq+b]
    x_pad = jnp.pad(x, ((0, 0), (0, 0), (1, 1), (1, 1 + 2 * (qp - q))))
    x2 = (x_pad.reshape(n, c, p, 2, qp, 2)
          .transpose(3, 0, 2, 4, 5, 1)
          .reshape(2, n, p, qp, 2 * c))

    wt = jnp.transpose(weight, (2, 3, 1, 0))             # (kh, kw, C, C_out)
    w01 = wt[:, 0:2].reshape(3, 2 * c, c_out)            # fused kw in {0,1}
    w2 = wt[:, 2]                                        # (3, C, C_out)
    bias_r = bias.reshape(1, c_out)

    tn = _pick_tn(c_out)
    n_j = c_out // tn
    th = _pick_th(n, n_j, c, tn, h_out, w_out, qp, x.dtype.itemsize)
    # Weight-tile axis outside the row-tile axis -> weights stay resident
    # across the innermost (row) loop.
    grid = (n, n_j, h_out // th)

    out = pl.pallas_call(
        _conv3x3s2_kernel,
        out_shape=jax.ShapeDtypeStruct((n, h_out, w_out, c_out), x.dtype),
        grid_spec=pltpu.PrefetchScalarGridSpec(
            num_scalar_prefetch=0,
            grid=grid,
            in_specs=[
                # body rows [i*th, i*th + th)
                pl.BlockSpec((2, 1, th, qp, 2 * c),
                             lambda b, j, i: (0, b, i, 0, 0)),
                # halo row i*th + th (block size 1 => element offset)
                pl.BlockSpec((2, 1, 1, qp, 2 * c),
                             lambda b, j, i: (0, b, (i + 1) * th, 0, 0)),
                pl.BlockSpec((3, 2 * c, tn), lambda b, j, i: (0, 0, j)),
                pl.BlockSpec((3, c, tn), lambda b, j, i: (0, 0, j)),
                pl.BlockSpec((1, tn), lambda b, j, i: (0, j)),
            ],
            out_specs=pl.BlockSpec((1, th, w_out, tn),
                                   lambda b, j, i: (b, i, 0, j)),
            scratch_shapes=[
                pltpu.VMEM((th * qp, tn), jnp.float32),
                pltpu.VMEM((th * qp, tn), jnp.float32),
            ],
        ),
        compiler_params=pltpu.CompilerParams(
            dimension_semantics=("parallel", "parallel", "parallel"),
            vmem_limit_bytes=40 * 1024 * 1024),
    )(x2, x2, w01, w2, bias_r)

    # NHWC -> NCHW to match the PyTorch module (plain XLA transpose; a
    # consumer that accepts NHWC directly could skip this extra HBM pass).
    return out.transpose(0, 3, 1, 2)


_conv3x3_stride2 = jax.jit(_conv3x3_stride2_impl)


# ---------------------------------------------------------------------------
# no-conv path: 2x2 stride-2 average pool
# ---------------------------------------------------------------------------
def _avgpool_kernel(x_ref, pair_ref, o_ref):
    # x_ref: (rb, 2W) -- one output row's two source rows, concatenated.
    # pair_ref: (W, W2) resident 0.25-valued pairing matrix.  o_ref: (rb, W2).
    w = pair_ref.shape[0]
    s = x_ref[:, :w] + x_ref[:, w:]                      # vertical add on VPU
    o_ref[...] = jnp.dot(s, pair_ref[...],
                         preferred_element_type=jnp.float32).astype(o_ref.dtype)


def _pick_rb(rows, w, itemsize, byte_budget=12 << 20):
    per_row = (2 * 2 * w + 2 * (w // 2)) * itemsize      # dbl-buf in + out
    cap = max(8, byte_budget // max(1, per_row))
    rb = min(rows, 2048, cap)
    if rows >= 8:
        rb = max(8, (rb // 8) * 8)
    return rb


def _avgpool2x2_impl(x):
    n, c, h, w = x.shape
    assert h % 2 == 0 and w % 2 == 0, "Downsample pool path assumes even H, W"
    h2, w2 = h // 2, w // 2
    rows = n * c * h2
    xr = x.reshape(rows, 2 * w)          # pure reshape: no gather copies

    # Horizontal pairing matrix with the 1/4 scale folded in; passed as an
    # input with a constant index_map so it is DMA'd once and stays resident.
    r_i = jax.lax.broadcasted_iota(jnp.int32, (w, w2), 0)
    c_i = jax.lax.broadcasted_iota(jnp.int32, (w, w2), 1)
    pair = jnp.where(r_i // 2 == c_i, 0.25, 0.0).astype(x.dtype)

    rb = _pick_rb(rows, w, x.dtype.itemsize)
    out = pl.pallas_call(
        _avgpool_kernel,
        out_shape=jax.ShapeDtypeStruct((rows, w2), x.dtype),
        grid_spec=pltpu.PrefetchScalarGridSpec(
            num_scalar_prefetch=0,
            grid=(pl.cdiv(rows, rb),),
            in_specs=[pl.BlockSpec((rb, 2 * w), lambda i: (i, 0)),
                      pl.BlockSpec((w, w2), lambda i: (0, 0))],
            out_specs=pl.BlockSpec((rb, w2), lambda i: (i, 0)),
        ),
        compiler_params=pltpu.CompilerParams(
            dimension_semantics=("parallel",),
            vmem_limit_bytes=32 * 1024 * 1024),
    )(xr, pair)
    # TODO(synk): for W/2 < 128 the output stores are lane-masked; very deep
    # UNet layers could flatten to (N*C, H2*W2) tiles for lane-dense stores.
    return out.reshape(n, c, h2, w2)


_pallas_avgpool2x2 = jax.jit(_avgpool2x2_impl)


# ---------------------------------------------------------------------------
# Downsample.forward
# ---------------------------------------------------------------------------
def downsample_forward(x, params, channels, use_conv, out_channels=None):
    """Equivalent of Downsample(channels, use_conv, dims=2, out_channels).forward(x)."""
    out_channels = out_channels or channels
    assert x.shape[1] == channels

    if not use_conv:
        assert channels == out_channels
        return _pallas_avgpool2x2(x)

    return _conv3x3_stride2(x, params["weight"], params["bias"])


# ---------------------------------------------------------------------------
if __name__ == "__main__":
    key = jax.random.PRNGKey(0)
    kx, kw_, kb = jax.random.split(key, 3)

    n, c, h, w = 2, 4, 16, 16
    c_out = 8
    x = jax.random.normal(kx, (n, c, h, w), dtype=jnp.float32)
    weight = 0.1 * jax.random.normal(kw_, (c_out, c, 3, 3), dtype=jnp.float32)
    bias = 0.1 * jax.random.normal(kb, (c_out,), dtype=jnp.float32)

    # use_conv=True path (Conv2d(c, c_out, 3, stride=2, padding=1))
    y = downsample_forward(x, {"weight": weight, "bias": bias},
                           channels=c, use_conv=True, out_channels=c_out)
    y = jax.block_until_ready(y)
    assert y.shape == (n, c_out, h // 2, w // 2), y.shape

    ref = jax.lax.conv_general_dilated(
        x, weight, window_strides=(2, 2), padding=((1, 1), (1, 1)),
        dimension_numbers=("NCHW", "OIHW", "NCHW"),
        precision=jax.lax.Precision.HIGHEST) + bias.reshape(1, c_out, 1, 1)
    assert jnp.allclose(y, ref, atol=2e-3, rtol=2e-3), \
        float(jnp.max(jnp.abs(y - ref)))

    # use_conv=False path (AvgPool2d(kernel_size=2, stride=2)), channels == out_channels
    y_pool = downsample_forward(x, None, channels=c, use_conv=False)
    y_pool = jax.block_until_ready(y_pool)
    assert y_pool.shape == (n, c, h // 2, w // 2), y_pool.shape
    ref_pool = x.reshape(n, c, h // 2, 2, w // 2, 2).mean(axis=(3, 5))
    assert jnp.allclose(y_pool, ref_pool, atol=1e-5)

    print("KERNEL_OK")
</pallas_src>

<mosaic_0001>
module attributes {stable_mosaic.version = 11 : i64} {
  func.func @_conv3x3s2_kernel(%arg0: i32, %arg1: i32, %arg2: i32, %arg3: memref<2x1x4x16x8xf32, #tpu.memory_space<vmem>>, %arg4: memref<2x1x1x16x8xf32, #tpu.memory_space<vmem>>, %arg5: memref<3x8x8xf32, #tpu.memory_space<vmem>>, %arg6: memref<3x4x8xf32, #tpu.memory_space<vmem>>, %arg7: memref<1x8xf32, #tpu.memory_space<vmem>>, %arg8: memref<1x4x8x8xf32, #tpu.memory_space<vmem>>, %arg9: memref<64x8xf32, #tpu.memory_space<vmem>>, %arg10: memref<64x8xf32, #tpu.memory_space<vmem>>) attributes {dimension_semantics = [#tpu.dimension_semantics<parallel>, #tpu.dimension_semantics<parallel>, #tpu.dimension_semantics<parallel>], iteration_bounds = array<i64: 2, 1, 2>, scalar_prefetch = 0 : i64, scratch_operands = 2 : i64, tpu.core_type = #tpu.core_type<tc>, window_params = [{transform_indices = @transform_0, window_bounds = array<i64: 2, 1, 4, 16, 8>}, {transform_indices = @transform_1, window_bounds = array<i64: 2, 1, 1, 16, 8>}, {transform_indices = @transform_2, window_bounds = array<i64: 3, 8, 8>}, {transform_indices = @transform_3, window_bounds = array<i64: 3, 4, 8>}, {transform_indices = @transform_4, window_bounds = array<i64: 1, 8>}, {transform_indices = @transform_5, window_bounds = array<i64: 1, 4, 8, 8>}]} {
    %c0 = arith.constant 0 : index
    %c0_0 = arith.constant 0 : index
    %0 = vector.load %arg7[%c0, %c0_0] : memref<1x8xf32, #tpu.memory_space<vmem>>, vector<1x8xf32>
    %c0_1 = arith.constant 0 : index
    %c0_2 = arith.constant 0 : index
    %c0_3 = arith.constant 0 : index
    %c0_4 = arith.constant 0 : index
    %c0_5 = arith.constant 0 : index
    %1 = vector.load %arg3[%c0_1, %c0_2, %c0_3, %c0_4, %c0_5] : memref<2x1x4x16x8xf32, #tpu.memory_space<vmem>>, vector<1x1x4x16x8xf32>
    %2 = vector.shape_cast %1 : vector<1x1x4x16x8xf32> to vector<4x16x8xf32>
    %c1 = arith.constant 1 : index
    %c0_6 = arith.constant 0 : index
    %c0_7 = arith.constant 0 : index
    %c0_8 = arith.constant 0 : index
    %c0_9 = arith.constant 0 : index
    %3 = vector.load %arg3[%c1, %c0_6, %c0_7, %c0_8, %c0_9] : memref<2x1x4x16x8xf32, #tpu.memory_space<vmem>>, vector<1x1x4x16x8xf32>
    %4 = vector.shape_cast %3 : vector<1x1x4x16x8xf32> to vector<4x16x8xf32>
    %5 = vector.shape_cast %2 : vector<4x16x8xf32> to vector<64x8xf32>
    %6 = vector.shape_cast %4 : vector<4x16x8xf32> to vector<64x8xf32>
    %c0_10 = arith.constant 0 : index
    %c0_11 = arith.constant 0 : index
    %c0_12 = arith.constant 0 : index
    %7 = vector.load %arg5[%c0_10, %c0_11, %c0_12] : memref<3x8x8xf32, #tpu.memory_space<vmem>>, vector<1x8x8xf32>
    %8 = vector.shape_cast %7 : vector<1x8x8xf32> to vector<8x8xf32>
    %cst = arith.constant dense<0.000000e+00> : vector<64x8xf32>
    %9 = tpu.matmul %5, %8, %cst {dimension_numbers = #tpu.dot_dimension_numbers<[1], [0], [0], [1], [0, 0, 1, 1], [], []>} : vector<64x8xf32>, vector<8x8xf32>, vector<64x8xf32> -> vector<64x8xf32>
    %c1_13 = arith.constant 1 : index
    %c0_14 = arith.constant 0 : index
    %c0_15 = arith.constant 0 : index
    %10 = vector.load %arg5[%c1_13, %c0_14, %c0_15] : memref<3x8x8xf32, #tpu.memory_space<vmem>>, vector<1x8x8xf32>
    %11 = vector.shape_cast %10 : vector<1x8x8xf32> to vector<8x8xf32>
    %cst_16 = arith.constant dense<0.000000e+00> : vector<64x8xf32>
    %12 = tpu.matmul %6, %11, %cst_16 {dimension_numbers = #tpu.dot_dimension_numbers<[1], [0], [0], [1], [0, 0, 1, 1], [], []>} : vector<64x8xf32>, vector<8x8xf32>, vector<64x8xf32> -> vector<64x8xf32>
    %13 = arith.addf %9, %12 : vector<64x8xf32>
    %14 = vector.broadcast %0 : vector<1x8xf32> to vector<64x8xf32>
    %15 = arith.addf %13, %14 : vector<64x8xf32>
    %c0_17 = arith.constant 0 : index
    %c0_18 = arith.constant 0 : index
    %16 = vector.load %arg9[%c0_17, %c0_18] : memref<64x8xf32, #tpu.memory_space<vmem>>, vector<64x8xf32>
    tpu.vector_store %arg9[%c0_17, %c0_18], %15 {strides = array<i32>} : memref<64x8xf32, #tpu.memory_space<vmem>>, vector<64x8xf32>,
    %17 = vector.extract_strided_slice %5 {offsets = [0, 0], sizes = [64, 4], strides = [1, 1]} : vector<64x8xf32> to vector<64x4xf32>
    %c0_19 = arith.constant 0 : index
    %c0_20 = arith.constant 0 : index
    %c0_21 = arith.constant 0 : index
    %18 = vector.load %arg6[%c0_19, %c0_20, %c0_21] : memref<3x4x8xf32, #tpu.memory_space<vmem>>, vector<1x4x8xf32>
    %19 = vector.shape_cast %18 : vector<1x4x8xf32> to vector<4x8xf32>
    %cst_22 = arith.constant dense<0.000000e+00> : vector<64x8xf32>
    %20 = tpu.matmul %17, %19, %cst_22 {dimension_numbers = #tpu.dot_dimension_numbers<[1], [0], [0], [1], [0, 0, 1, 1], [], []>} : vector<64x4xf32>, vector<4x8xf32>, vector<64x8xf32> -> vector<64x8xf32>
    %21 = vector.extract_strided_slice %6 {offsets = [0, 0], sizes = [64, 4], strides = [1, 1]} : vector<64x8xf32> to vector<64x4xf32>
    %c1_23 = arith.constant 1 : index
    %c0_24 = arith.constant 0 : index
    %c0_25 = arith.constant 0 : index
    %22 = vector.load %arg6[%c1_23, %c0_24, %c0_25] : memref<3x4x8xf32, #tpu.memory_space<vmem>>, vector<1x4x8xf32>
    %23 = vector.shape_cast %22 : vector<1x4x8xf32> to vector<4x8xf32>
    %cst_26 = arith.constant dense<0.000000e+00> : vector<64x8xf32>
    %24 = tpu.matmul %21, %23, %cst_26 {dimension_numbers = #tpu.dot_dimension_numbers<[1], [0], [0], [1], [0, 0, 1, 1], [], []>} : vector<64x4xf32>, vector<4x8xf32>, vector<64x8xf32> -> vector<64x8xf32>
    %25 = arith.addf %20, %24 : vector<64x8xf32>
    %c0_27 = arith.constant 0 : index
    %c0_28 = arith.constant 0 : index
    %26 = vector.load %arg10[%c0_27, %c0_28] : memref<64x8xf32, #tpu.memory_space<vmem>>, vector<64x8xf32>
    tpu.vector_store %arg10[%c0_27, %c0_28], %25 {strides = array<i32>} : memref<64x8xf32, #tpu.memory_space<vmem>>, vector<64x8xf32>,
    %27 = vector.extract_strided_slice %2 {offsets = [1, 0, 0], sizes = [3, 16, 8], strides = [1, 1, 1]} : vector<4x16x8xf32> to vector<3x16x8xf32>
    %28 = vector.shape_cast %27 : vector<3x16x8xf32> to vector<48x8xf32>
    %c0_29 = arith.constant 0 : index
    %c0_30 = arith.constant 0 : index
    %29 = vector.load %arg9[%c0_29, %c0_30] : memref<64x8xf32, #tpu.memory_space<vmem>>, vector<48x8xf32>
    %c2 = arith.constant 2 : index
    %c0_31 = arith.constant 0 : index
    %c0_32 = arith.constant 0 : index
    %30 = vector.load %arg5[%c2, %c0_31, %c0_32] : memref<3x8x8xf32, #tpu.memory_space<vmem>>, vector<1x8x8xf32>
    %31 = vector.shape_cast %30 : vector<1x8x8xf32> to vector<8x8xf32>
    %cst_33 = arith.constant dense<0.000000e+00> : vector<48x8xf32>
    %32 = tpu.matmul %28, %31, %cst_33 {dimension_numbers = #tpu.dot_dimension_numbers<[1], [0], [0], [1], [0, 0, 1, 1], [], []>} : vector<48x8xf32>, vector<8x8xf32>, vector<48x8xf32> -> vector<48x8xf32>
    %33 = arith.addf %29, %32 : vector<48x8xf32>
    %c0_34 = arith.constant 0 : index
    %c0_35 = arith.constant 0 : index
    %34 = vector.load %arg9[%c0_34, %c0_35] : memref<64x8xf32, #tpu.memory_space<vmem>>, vector<48x8xf32>
    tpu.vector_store %arg9[%c0_34, %c0_35], %33 {strides = array<i32>} : memref<64x8xf32, #tpu.memory_space<vmem>>, vector<48x8xf32>,
    %c0_36 = arith.constant 0 : index
    %c0_37 = arith.constant 0 : index
    %35 = vector.load %arg10[%c0_36, %c0_37] : memref<64x8xf32, #tpu.memory_space<vmem>>, vector<48x8xf32>
    %36 = vector.extract_strided_slice %28 {offsets = [0, 0], sizes = [48, 4], strides = [1, 1]} : vector<48x8xf32> to vector<48x4xf32>
    %c2_38 = arith.constant 2 : index
    %c0_39 = arith.constant 0 : index
    %c0_40 = arith.constant 0 : index
    %37 = vector.load %arg6[%c2_38, %c0_39, %c0_40] : memref<3x4x8xf32, #tpu.memory_space<vmem>>, vector<1x4x8xf32>
    %38 = vector.shape_cast %37 : vector<1x4x8xf32> to vector<4x8xf32>
    %cst_41 = arith.constant dense<0.000000e+00> : vector<48x8xf32>
    %39 = tpu.matmul %36, %38, %cst_41 {dimension_numbers = #tpu.dot_dimension_numbers<[1], [0], [0], [1], [0, 0, 1, 1], [], []>} : vector<48x4xf32>, vector<4x8xf32>, vector<48x8xf32> -> vector<48x8xf32>
    %40 = arith.addf %35, %39 : vector<48x8xf32>
    %c0_42 = arith.constant 0 : index
    %c0_43 = arith.constant 0 : index
    %41 = vector.load %arg10[%c0_42, %c0_43] : memref<64x8xf32, #tpu.memory_space<vmem>>, vector<48x8xf32>
    tpu.vector_store %arg10[%c0_42, %c0_43], %40 {strides = array<i32>} : memref<64x8xf32, #tpu.memory_space<vmem>>, vector<48x8xf32>,
    %c0_44 = arith.constant 0 : index
    %c0_45 = arith.constant 0 : index
    %c0_46 = arith.constant 0 : index
    %c0_47 = arith.constant 0 : index
    %c0_48 = arith.constant 0 : index
    %42 = vector.load %arg4[%c0_44, %c0_45, %c0_46, %c0_47, %c0_48] : memref<2x1x1x16x8xf32, #tpu.memory_space<vmem>>, vector<1x1x1x16x8xf32>
    %43 = vector.shape_cast %42 : vector<1x1x1x16x8xf32> to vector<16x8xf32>
    %c48 = arith.constant 48 : index
    %c0_49 = arith.constant 0 : index
    %44 = vector.load %arg9[%c48, %c0_49] : memref<64x8xf32, #tpu.memory_space<vmem>>, vector<16x8xf32>
    %c2_50 = arith.constant 2 : index
    %c0_51 = arith.constant 0 : index
    %c0_52 = arith.constant 0 : index
    %45 = vector.load %arg5[%c2_50, %c0_51, %c0_52] : memref<3x8x8xf32, #tpu.memory_space<vmem>>, vector<1x8x8xf32>
    %46 = vector.shape_cast %45 : vector<1x8x8xf32> to vector<8x8xf32>
    %cst_53 = arith.constant dense<0.000000e+00> : vector<16x8xf32>
    %47 = tpu.matmul %43, %46, %cst_53 {dimension_numbers = #tpu.dot_dimension_numbers<[1], [0], [0], [1], [0, 0, 1, 1], [], []>} : vector<16x8xf32>, vector<8x8xf32>, vector<16x8xf32> -> vector<16x8xf32>
    %48 = arith.addf %44, %47 : vector<16x8xf32>
    %c48_54 = arith.constant 48 : index
    %c0_55 = arith.constant 0 : index
    %49 = vector.load %arg9[%c48_54, %c0_55] : memref<64x8xf32, #tpu.memory_space<vmem>>, vector<16x8xf32>
    tpu.vector_store %arg9[%c48_54, %c0_55], %48 {strides = array<i32>} : memref<64x8xf32, #tpu.memory_space<vmem>>, vector<16x8xf32>,
    %c48_56 = arith.constant 48 : index
    %c0_57 = arith.constant 0 : index
    %50 = vector.load %arg10[%c48_56, %c0_57] : memref<64x8xf32, #tpu.memory_space<vmem>>, vector<16x8xf32>
    %51 = vector.extract_strided_slice %43 {offsets = [0, 0], sizes = [16, 4], strides = [1, 1]} : vector<16x8xf32> to vector<16x4xf32>
    %c2_58 = arith.constant 2 : index
    %c0_59 = arith.constant 0 : index
    %c0_60 = arith.constant 0 : index
    %52 = vector.load %arg6[%c2_58, %c0_59, %c0_60] : memref<3x4x8xf32, #tpu.memory_space<vmem>>, vector<1x4x8xf32>
    %53 = vector.shape_cast %52 : vector<1x4x8xf32> to vector<4x8xf32>
    %cst_61 = arith.constant dense<0.000000e+00> : vector<16x8xf32>
    %54 = tpu.matmul %51, %53, %cst_61 {dimension_numbers = #tpu.dot_dimension_numbers<[1], [0], [0], [1], [0, 0, 1, 1], [], []>} : vector<16x4xf32>, vector<4x8xf32>, vector<16x8xf32> -> vector<16x8xf32>
    %55 = arith.addf %50, %54 : vector<16x8xf32>
    %c48_62 = arith.constant 48 : index
    %c0_63 = arith.constant 0 : index
    %56 = vector.load %arg10[%c48_62, %c0_63] : memref<64x8xf32, #tpu.memory_space<vmem>>, vector<16x8xf32>
    tpu.vector_store %arg10[%c48_62, %c0_63], %55 {strides = array<i32>} : memref<64x8xf32, #tpu.memory_space<vmem>>, vector<16x8xf32>,
    %c0_64 = arith.constant 0 : index
    %c0_65 = arith.constant 0 : index
    %57 = vector.load %arg9[%c0_64, %c0_65] : memref<64x8xf32, #tpu.memory_space<vmem>>, vector<64x8xf32>
    %58 = vector.shape_cast %57 : vector<64x8xf32> to vector<4x16x8xf32>
    %c0_66 = arith.constant 0 : index
    %c0_67 = arith.constant 0 : index
    %59 = vector.load %arg10[%c0_66, %c0_67] : memref<64x8xf32, #tpu.memory_space<vmem>>, vector<64x8xf32>
    %60 = vector.shape_cast %59 : vector<64x8xf32> to vector<4x16x8xf32>
    %61 = vector.extract_strided_slice %58 {offsets = [0, 0, 0], sizes = [4, 8, 8], strides = [1, 1, 1]} : vector<4x16x8xf32> to vector<4x8x8xf32>
    %62 = vector.extract_strided_slice %60 {offsets = [0, 1, 0], sizes = [4, 8, 8], strides = [1, 1, 1]} : vector<4x16x8xf32> to vector<4x8x8xf32>
    %63 = arith.addf %61, %62 : vector<4x8x8xf32>
    %c0_68 = arith.constant 0 : index
    %c0_69 = arith.constant 0 : index
    %c0_70 = arith.constant 0 : index
    %c0_71 = arith.constant 0 : index
    %64 = vector.load %arg8[%c0_68, %c0_69, %c0_70, %c0_71] : memref<1x4x8x8xf32, #tpu.memory_space<vmem>>, vector<1x4x8x8xf32>
    %65 = vector.shape_cast %64 : vector<1x4x8x8xf32> to vector<4x8x8xf32>
    %66 = vector.shape_cast %63 : vector<4x8x8xf32> to vector<1x4x8x8xf32>
    tpu.vector_store %arg8[%c0_68, %c0_69, %c0_70, %c0_71], %66 {strides = array<i32>} : memref<1x4x8x8xf32, #tpu.memory_space<vmem>>, vector<1x4x8x8xf32>,
    return
  }
  func.func @transform_0(%arg0: i32, %arg1: i32, %arg2: i32) -> (i32, i32, i32, i32, i32) {
    %c0_i32 = arith.constant 0 : i32
    %c0_i32_0 = arith.constant 0 : i32
    %c0_i32_1 = arith.constant 0 : i32
    %c0_i32_2 = arith.constant 0 : i32
    return %c0_i32, %arg0, %arg2, %c0_i32_0, %c0_i32_1 : i32, i32, i32, i32, i32
  }
  func.func @transform_1(%arg0: i32, %arg1: i32, %arg2: i32) -> (i32, i32, i32, i32, i32) {
    %c1_i32 = arith.constant 1 : i32
    %0 = arith.addi %arg2, %c1_i32 : i32
    %c4_i32 = arith.constant 4 : i32
    %1 = arith.muli %0, %c4_i32 : i32
    %c0_i32 = arith.constant 0 : i32
    %c0_i32_0 = arith.constant 0 : i32
    %c0_i32_1 = arith.constant 0 : i32
    %c0_i32_2 = arith.constant 0 : i32
    return %c0_i32, %arg0, %1, %c0_i32_0, %c0_i32_1 : i32, i32, i32, i32, i32
  }
  func.func @transform_2(%arg0: i32, %arg1: i32, %arg2: i32) -> (i32, i32, i32) {
    %c0_i32 = arith.constant 0 : i32
    %c0_i32_0 = arith.constant 0 : i32
    %c0_i32_1 = arith.constant 0 : i32
    return %c0_i32, %c0_i32_0, %arg1 : i32, i32, i32
  }
  func.func @transform_3(%arg0: i32, %arg1: i32, %arg2: i32) -> (i32, i32, i32) {
    %c0_i32 = arith.constant 0 : i32
    %c0_i32_0 = arith.constant 0 : i32
    %c0_i32_1 = arith.constant 0 : i32
    return %c0_i32, %c0_i32_0, %arg1 : i32, i32, i32
  }
  func.func @transform_4(%arg0: i32, %arg1: i32, %arg2: i32) -> (i32, i32) {
    %c0_i32 = arith.constant 0 : i32
    %c0_i32_0 = arith.constant 0 : i32
    return %c0_i32, %arg1 : i32, i32
  }
  func.func @transform_5(%arg0: i32, %arg1: i32, %arg2: i32) -> (i32, i32, i32, i32) {
    %c0_i32 = arith.constant 0 : i32
    %c0_i32_0 = arith.constant 0 : i32
    return %arg0, %arg2, %c0_i32, %arg1 : i32, i32, i32, i32
  }
}

</mosaic_0001>

<llo_original>
// kernel: _conv3x3_stride2_impl.1
$region0: #{_conv3x3_stride2_impl.1}
  #allocation0 [shape = 'u32[]', space=smem, size = 0x4, offset = 0x4, fixed_abs, tag = 'smem constant byte address 0x4 - core index']
  #allocation1 [shape = 'u32[144,128]{1,0:T(1,128)}', space=vmem, size = 0x12000, scoped, tag = 'internal scratch']
  #allocation2 [shape = 'f32[64,8]{1,0:T(8,128)}', space=vmem, size = 0x8000, scoped, tag = 'scratch operand']
  #allocation3 [shape = 'f32[64,8]{1,0:T(8,128)}', space=vmem, size = 0x8000, scoped, tag = 'scratch operand']
  %s0 = inlined_call_operand.vmem [shape: f32[2,2,9,16,8], index: 0, kind: input, shape index: {}, may-alias: {0,1}]
  %s1 = inlined_call_operand.vmem [shape: f32[2,2,9,16,8], index: 1, kind: input, shape index: {}, may-alias: {0,1}]
  %s2 = inlined_call_operand.vmem [shape: f32[3,8,8], index: 2, kind: input, shape index: {}]
  %s3 = inlined_call_operand.vmem [shape: f32[3,4,8], index: 3, kind: input, shape index: {}]
  %s4 = inlined_call_operand.vmem [shape: f32[1,8], index: 4, kind: input, shape index: {}]
  %s5 = inlined_call_operand.vmem [shape: f32[2,8,8,8], index: 5, kind: output, shape index: {}]
  %s6 = sld [smem:[#allocation0]]
  $region143: #{_conv3x3_stride2_impl.1} parent=0
    _
  %s8 = ssub.s32 1, %s6
  %s9 = scalar_select 0, %s8, %s6
  $region1: #{_conv3x3_stride2_impl.1} parent=0
    #allocation4 [shape = 'u8[131072]{0}', space=vmem, size = 0x20000, scoped, tag = 'input window, operand 0']
    #allocation5 [shape = 'u8[32768]{0}', space=vmem, size = 0x8000, scoped, tag = 'input window, operand 1']
    loop: start=0, step=1, limit=6
    $region2: #{_conv3x3_stride2_impl.1} parent=1 // loop_pre_header
      _
    $region3: #{_conv3x3_stride2_impl.1} parent=1 // loop_header
      %s11 = sphi 0, %s15
      %p12 = scmp.ge.s32.totalorder %s11, 6
      %s18 = sphi 0, %s37
      %s19 = sphi 0, %s33
      %s20 = sphi 0, %s29
      %s21 = sphi 0, %s18
      %s22 = sphi 0, %s19
      %s23 = sphi 0, %s20
      %s24 = sphi 0, %s21
      %s25 = sphi 0, %s22
      %s26 = sphi 0, %s23
      %s42 = sphi 0, %s44
      %s45 = sphi 0, %s42
      %s46 = sphi 0, %s45
      %s62 = sphi 0, %s46
      %s74 = sphi 0, %s76
      %s77 = sphi 0, %s74
      %s78 = sphi 0, %s77
      %s94 = sphi 0, %s78
      %s100 = sphi 0, %s102
      %s103 = sphi 0, %s100
      %s104 = sphi 0, %s103
      %s120 = sphi 0, %s104
      %s126 = sphi 0, %s128
      %s129 = sphi 0, %s126
      %s130 = sphi 0, %s129
      %s146 = sphi 0, %s130
      %s152 = sphi 0, %s154
      %s155 = sphi 0, %s152
      %s156 = sphi 0, %s155
      %s172 = sphi 0, %s156
      %s182 = sphi 0, %s184
      %s185 = sphi 0, %s182
      %s186 = sphi 0, %s185
      %s202 = sphi 0, %s186
    $region4: #{_conv3x3_stride2_impl.1} parent=1 // loop_header_branch
      %14 = sbr.rel (%p12) target = $region8
    $region5: #{_conv3x3_stride2_impl.1} parent=1 // loop_body
      %s16 = ssub.s32 %s11, 1
      %s17 = ssub.s32 %s11, 2
      %s27 = sadd.s32 1, %s20
      %p28 = scmp.ge.s32.totalorder %s27, 2
      %s29 = scalar_select %p28, 0, %s27
      %s30 = sadd.s32 1, %s19
      %s31 = scalar_select %p28, %s30, %s19
      %p32 = scmp.ge.s32.totalorder %s31, 1
      %s33 = scalar_select %p32, 0, %s31
      %s34 = sadd.s32 1, %s18
      %s35 = scalar_select %p32, %s34, %s18
      %p36 = scmp.ge.s32.totalorder %s35, 2
      %s37 = scalar_select %p36, 0, %s35
      %s38 = ssub.s32 %s18, %s37
      %s39 = ssub.s32 %s20, %s29
      %s40 = sor.u32 %s38, %s39
      %p41 = scmp.eq.s32.totalorder %s40, 0
      %s43 = sadd.s32 %s42, 1
      %s44 = scalar_select %p41, %s42, %s43
      %p47 = pneg %p41
      %p48 = scmp.eq.s32.totalorder %s11, 3
      %p49 = por %p47, %p48
      %p50 = scmp.ne.s32.totalorder %s42, %s45
      %p51 = scmp.eq.s32.totalorder %s11, 0
      %p52 = por %p50, %p51
      %p53 = scmp.ne.s32.totalorder %s42, %s45
      %p54 = scmp.eq.s32.totalorder %s16, 3
      %p55 = por %p53, %p54
      %p56 = scmp.ne.s32.totalorder %s45, %s46
      %p57 = scmp.eq.s32.totalorder %s16, 0
      %p58 = por %p56, %p57
      %p59 = scmp.ne.s32.totalorder %s45, %s46
      %p60 = scmp.eq.s32.totalorder %s17, 3
      %p61 = por %p59, %p60
      %p63 = scmp.ne.s32.totalorder %s46, %s62
      %p64 = scmp.eq.s32.totalorder %s17, 0
      %p65 = por %p63, %p64
      %s66 = sadd.s32 %s20, 1
      %s67 = smul.u32 %s66, 4
      %s68 = sadd.s32 %s29, 1
      %s69 = smul.u32 %s68, 4
      %s70 = ssub.s32 %s18, %s37
      %s71 = ssub.s32 %s67, %s69
      %s72 = sor.u32 %s70, %s71
      %p73 = scmp.eq.s32.totalorder %s72, 0
      %s75 = sadd.s32 %s74, 1
      %s76 = scalar_select %p73, %s74, %s75
      %p79 = pneg %p73
      %p80 = scmp.eq.s32.totalorder %s11, 3
      %p81 = por %p79, %p80
      %p82 = scmp.ne.s32.totalorder %s74, %s77
      %p83 = scmp.eq.s32.totalorder %s11, 0
      %p84 = por %p82, %p83
      %p85 = scmp.ne.s32.totalorder %s74, %s77
      %p86 = scmp.eq.s32.totalorder %s16, 3
      %p87 = por %p85, %p86
      %p88 = scmp.ne.s32.totalorder %s77, %s78
      %p89 = scmp.eq.s32.totalorder %s16, 0
      %p90 = por %p88, %p89
      %p91 = scmp.ne.s32.totalorder %s77, %s78
      %p92 = scmp.eq.s32.totalorder %s17, 3
      %p93 = por %p91, %p92
      %p95 = scmp.ne.s32.totalorder %s78, %s94
      %p96 = scmp.eq.s32.totalorder %s17, 0
      %p97 = por %p95, %p96
      %s98 = ssub.s32 %s19, %s33
      %p99 = scmp.eq.s32.totalorder %s98, 0
      %s101 = sadd.s32 %s100, 1
      %s102 = scalar_select %p99, %s100, %s101
      %p105 = pneg %p99
      %p106 = scmp.eq.s32.totalorder %s11, 3
      %p107 = por %p105, %p106
      %p108 = scmp.ne.s32.totalorder %s100, %s103
      %p109 = scmp.eq.s32.totalorder %s11, 0
      %p110 = por %p108, %p109
      %p111 = scmp.ne.s32.totalorder %s100, %s103
      %p112 = scmp.eq.s32.totalorder %s16, 3
      %p113 = por %p111, %p112
      %p114 = scmp.ne.s32.totalorder %s103, %s104
      %p115 = scmp.eq.s32.totalorder %s16, 0
      %p116 = por %p114, %p115
      %p117 = scmp.ne.s32.totalorder %s103, %s104
      %p118 = scmp.eq.s32.totalorder %s17, 3
      %p119 = por %p117, %p118
      %p121 = scmp.ne.s32.totalorder %s104, %s120
      %p122 = scmp.eq.s32.totalorder %s17, 0
      %p123 = por %p121, %p122
      %s124 = ssub.s32 %s19, %s33
      %p125 = scmp.eq.s32.totalorder %s124, 0
      %s127 = sadd.s32 %s126, 1
      %s128 = scalar_select %p125, %s126, %s127
      %p131 = pneg %p125
      %p132 = scmp.eq.s32.totalorder %s11, 3
      %p133 = por %p131, %p132
      %p134 = scmp.ne.s32.totalorder %s126, %s129
      %p135 = scmp.eq.s32.totalorder %s11, 0
      %p136 = por %p134, %p135
      %p137 = scmp.ne.s32.totalorder %s126, %s129
      %p138 = scmp.eq.s32.totalorder %s16, 3
      %p139 = por %p137, %p138
      %p140 = scmp.ne.s32.totalorder %s129, %s130
      %p141 = scmp.eq.s32.totalorder %s16, 0
      %p142 = por %p140, %p141
      %p143 = scmp.ne.s32.totalorder %s129, %s130
      %p144 = scmp.eq.s32.totalorder %s17, 3
      %p145 = por %p143, %p144
      %p147 = scmp.ne.s32.totalorder %s130, %s146
      %p148 = scmp.eq.s32.totalorder %s17, 0
      %p149 = por %p147, %p148
      %s150 = ssub.s32 %s19, %s33
      %p151 = scmp.eq.s32.totalorder %s150, 0
      %s153 = sadd.s32 %s152, 1
      %s154 = scalar_select %p151, %s152, %s153
      %p157 = pneg %p151
      %p158 = scmp.eq.s32.totalorder %s11, 3
      %p159 = por %p157, %p158
      %p160 = scmp.ne.s32.totalorder %s152, %s155
      %p161 = scmp.eq.s32.totalorder %s11, 0
      %p162 = por %p160, %p161
      %p163 = scmp.ne.s32.totalorder %s152, %s155
      %p164 = scmp.eq.s32.totalorder %s16, 3
      %p165 = por %p163, %p164
      %p166 = scmp.ne.s32.totalorder %s155, %s156
      %p167 = scmp.eq.s32.totalorder %s16, 0
      %p168 = por %p166, %p167
      %p169 = scmp.ne.s32.totalorder %s155, %s156
      %p170 = scmp.eq.s32.totalorder %s17, 3
      %p171 = por %p169, %p170
      %p173 = scmp.ne.s32.totalorder %s156, %s172
      %p174 = scmp.eq.s32.totalorder %s17, 0
      %p175 = por %p173, %p174
      %s176 = ssub.s32 %s18, %s37
      %s177 = ssub.s32 %s20, %s29
      %s178 = sor.u32 %s176, %s177
      %s179 = ssub.s32 %s19, %s33
      %s180 = sor.u32 %s178, %s179
      %p181 = scmp.eq.s32.totalorder %s180, 0
      %s183 = sadd.s32 %s182, 1
      %s184 = scalar_select %p181, %s182, %s183
      %p187 = pneg %p181
      %p188 = scmp.eq.s32.totalorder %s11, 3
      %p189 = por %p187, %p188
      %p190 = scmp.ne.s32.totalorder %s182, %s185
      %p191 = scmp.eq.s32.totalorder %s11, 0
      %p192 = por %p190, %p191
      %p193 = scmp.ne.s32.totalorder %s182, %s185
      %p194 = scmp.eq.s32.totalorder %s16, 3
      %p195 = por %p193, %p194
      %p196 = scmp.ne.s32.totalorder %s185, %s186
      %p197 = scmp.eq.s32.totalorder %s16, 0
      %p198 = por %p196, %p197
      %p199 = scmp.ne.s32.totalorder %s185, %s186
      %p200 = scmp.eq.s32.totalorder %s17, 3
      %p201 = por %p199, %p200
      %p203 = scmp.ne.s32.totalorder %s186, %s202
      %p204 = scmp.eq.s32.totalorder %s17, 0
      %p205 = por %p203, %p204
      %p206 = scmp.le.s32.totalorder 1, %s11
      %p207 = scmp.lt.s32.totalorder %s11, 5
      %p208 = pnand %p206, %p207
      %p209 = pneg %p208
      // Predicated region
      $region9: #{_conv3x3_stride2_impl.1} parent=5 // pred_check
        _
      $region10: #{_conv3x3_stride2_impl.1} parent=5 // pred_check_branch
        %211 = sbr.rel (%p208) target = $region12
      $region11: #{_conv3x3_stride2_impl.1} parent=5 // pred_region
        %s212 = ssub.s32 %s11, 1
        // Predicated region
        $region13: #{_conv3x3_stride2_impl.1} parent=11 // pred_check
          %p213 = pneg %p116
        $region14: #{_conv3x3_stride2_impl.1} parent=11 // pred_check_branch
          %215 = sbr.rel (%p213) target = $region16
        $region15: #{_conv3x3_stride2_impl.1} parent=11 // pred_region
          %p216 = scmp.lt.s32.totalorder %s22, 0
          %s217 = scalar_select %p216, %s22, 0
          %s218 = smul.addr %s217, 8
          %s219 = scalar_lea.vmem %s2, %s218
        $region16: #{_conv3x3_stride2_impl.1} parent=11 // pred_fallthru
          _
        // Predicated region
        $region17: #{_conv3x3_stride2_impl.1} parent=11 // pred_check
          %p220 = pneg %p142
        $region18: #{_conv3x3_stride2_impl.1} parent=11 // pred_check_branch
          %222 = sbr.rel (%p220) target = $region20
        $region19: #{_conv3x3_stride2_impl.1} parent=11 // pred_region
          %p223 = scmp.lt.s32.totalorder %s22, 0
          %s224 = scalar_select %p223, %s22, 0
          %s225 = smul.addr %s224, 4
          %s226 = scalar_lea.vmem %s3, %s225
        $region20: #{_conv3x3_stride2_impl.1} parent=11 // pred_fallthru
          _
        // Predicated region
        $region21: #{_conv3x3_stride2_impl.1} parent=11 // pred_check
          %p227 = pneg %p168
        $region22: #{_conv3x3_stride2_impl.1} parent=11 // pred_check_branch
          %229 = sbr.rel (%p227) target = $region24
        $region23: #{_conv3x3_stride2_impl.1} parent=11 // pred_region
          %p230 = scmp.lt.s32.totalorder %s22, 0
          %s231 = scalar_select %p230, %s22, 0
          %s232 = scalar_lea.vmem %s4, %s231
        $region24: #{_conv3x3_stride2_impl.1} parent=11 // pred_fallthru
          _
      $region12: #{_conv3x3_stride2_impl.1} parent=5 // pred_fallthru
        _
      %p233 = scmp.lt.s32.totalorder %s11, 4
      // Predicated region
      $region25: #{_conv3x3_stride2_impl.1} parent=5 // pred_check
        %p234 = pneg %p233
      $region26: #{_conv3x3_stride2_impl.1} parent=5 // pred_check_branch
        %236 = sbr.rel (%p234) target = $region28
      $region27: #{_conv3x3_stride2_impl.1} parent=5 // pred_region
        // Predicated region
        $region29: #{_conv3x3_stride2_impl.1} parent=27 // pred_check
          %p237 = pneg %p52
        $region30: #{_conv3x3_stride2_impl.1} parent=27 // pred_check_branch
          %239 = sbr.rel (%p237) target = $region32
        $region31: #{_conv3x3_stride2_impl.1} parent=27 // pred_region
          %s240 = sand.u32 %s42, 1
          %s241 = sand.u32 %s42, 1
          %s242 = smul.addr %s241, 128
          %s243 = scalar_lea.vmem [#allocation4], %s242
          %s244 = smul.u32 4, %s20
          %s245 = ssub.s32 9, %s244
          %p246 = scmp.lt.s32.totalorder %s245, 4
          %s247 = scalar_select %p246, %s245, 4
          %s248 = smul.u32 256, %s247
          %s249 = smul.u32 %s248, 2
          %p250 = scmp.ne.s32.totalorder 0, %s249
          %s251 = smul.addr %s244, 2
          %s252 = smul.addr %s18, 18
          %s253 = sadd.s32 %s251, %s252
          %s254 = smul.addr %s253, 8
          %s255 = scalar_lea.vmem %s0, %s254
          %s256 = smul.u32 %s247, 2
          // Predicated region
          $region33: #{_conv3x3_stride2_impl.1} parent=31 // pred_check
            %p257 = pneg %p250
          $region34: #{_conv3x3_stride2_impl.1} parent=31 // pred_check_branch
            %259 = sbr.rel (%p257) target = $region36
          $region35: #{_conv3x3_stride2_impl.1} parent=31 // pred_region
            // Predicated region
            $region37: #{_conv3x3_stride2_impl.1} parent=35 // pred_check
              _
            $region38: #{_conv3x3_stride2_impl.1} parent=35 // pred_check_branch
              %261 = sbr.rel (0) target = $region40
            $region39: #{_conv3x3_stride2_impl.1} parent=35 // pred_region
              // Predicated region
              $region59: #{_conv3x3_stride2_impl.1} parent=39 // pred_check
                _
              $region60: #{_conv3x3_stride2_impl.1} parent=39 // pred_check_branch
                %343 = sbr.rel (0) target = $region62
              $region61: #{_conv3x3_stride2_impl.1} parent=39 // pred_region
                %s344 = sshrl.u32 %s256, 3
                // While loop
                $region63: #{_conv3x3_stride2_impl.1} parent=61 // loop_pre_header
                  _
                $region64: #{_conv3x3_stride2_impl.1} parent=61 // loop_header
                  %s346 = sphi 0, %s348
                  %p347 = scmp.ge.s32.totalorder %s346, %s344
                  %s351 = sphi 0, %s388
                  %s352 = sphi %s255, %s391
                  %s353 = sphi %s243, %s392
                $region65: #{_conv3x3_stride2_impl.1} parent=61 // loop_header_branch
                  %350 = sbr.rel (%p347) target = $region69
                $region66: #{_conv3x3_stride2_impl.1} parent=61 // loop_body
                  %v354 = vld [vmem:[%s352] sm:$0xff]
                  %355 = vst [vmem:[%s353] sm:$0xff] %v354
                  %v356 = vld [vmem:[%s352 + $0x8] sm:$0xff]
                  %357 = vst [vmem:[%s353 + $0x8] sm:$0xff] %v356
                  %v358 = vld [vmem:[%s352 + $0x10] sm:$0xff]
                  %359 = vst [vmem:[%s353 + $0x10] sm:$0xff] %v358
                  %v360 = vld [vmem:[%s352 + $0x18] sm:$0xff]
                  %361 = vst [vmem:[%s353 + $0x18] sm:$0xff] %v360
                  %v362 = vld [vmem:[%s352 + $0x20] sm:$0xff]
                  %363 = vst [vmem:[%s353 + $0x20] sm:$0xff] %v362
                  %v364 = vld [vmem:[%s352 + $0x28] sm:$0xff]
                  %365 = vst [vmem:[%s353 + $0x28] sm:$0xff] %v364
                  %v366 = vld [vmem:[%s352 + $0x30] sm:$0xff]
                  %367 = vst [vmem:[%s353 + $0x30] sm:$0xff] %v366
                  %v368 = vld [vmem:[%s352 + $0x38] sm:$0xff]
                  %369 = vst [vmem:[%s353 + $0x38] sm:$0xff] %v368
                  %v370 = vld [vmem:[%s352 + $0x120] sm:$0xff]
                  %371 = vst [vmem:[%s353 + $0x40] sm:$0xff] %v370
                  %v372 = vld [vmem:[%s352 + $0x128] sm:$0xff]
                  %373 = vst [vmem:[%s353 + $0x48] sm:$0xff] %v372
                  %v374 = vld [vmem:[%s352 + $0x130] sm:$0xff]
                  %375 = vst [vmem:[%s353 + $0x50] sm:$0xff] %v374
                  %v376 = vld [vmem:[%s352 + $0x138] sm:$0xff]
                  %377 = vst [vmem:[%s353 + $0x58] sm:$0xff] %v376
                  %v378 = vld [vmem:[%s352 + $0x140] sm:$0xff]
                  %379 = vst [vmem:[%s353 + $0x60] sm:$0xff] %v378
                  %v380 = vld [vmem:[%s352 + $0x148] sm:$0xff]
                  %381 = vst [vmem:[%s353 + $0x68] sm:$0xff] %v380
                  %v382 = vld [vmem:[%s352 + $0x150] sm:$0xff]
                  %383 = vst [vmem:[%s353 + $0x70] sm:$0xff] %v382
                  %v384 = vld [vmem:[%s352 + $0x158] sm:$0xff]
                  %385 = vst [vmem:[%s353 + $0x78] sm:$0xff] %v384
                  %s386 = sadd.s32 1, %s351
                  %p387 = scmp.ge.s32.totalorder %s386, %s344
                  %s388 = scalar_select %p387, 0, %s386
                  %s389 = smul.u32 %s388, 64
                  %s390 = smul.u32 %s388, 64
                  %s391 = scalar_lea.vmem %s255, %s389
                  %s392 = scalar_lea.vmem %s243, %s390 [#allocation4]
                $region67: #{_conv3x3_stride2_impl.1} parent=61 // loop_footer
                  %s348 = sadd.s32 %s346, 1
                $region68: #{_conv3x3_stride2_impl.1} parent=61 // loop_footer_branch
                  %345 = sbr.rel target = $region64
                $region69: #{_conv3x3_stride2_impl.1} parent=61 // loop_exit
                  _
                %s393 = sshrl.u32 %s256, 3
                %s394 = sand.u32 %s256, 7
                %s395 = smul.u32 %s393, 8
                %s396 = smul.u32 8, %s395
                %s397 = scalar_lea.vmem %s255, %s396
                %s398 = smul.u32 8, %s395
                %s399 = scalar_lea.vmem %s243, %s398 [#allocation4]
                // While loop
                $region70: #{_conv3x3_stride2_impl.1} parent=61 // loop_pre_header
                  _
                $region71: #{_conv3x3_stride2_impl.1} parent=61 // loop_header
                  %s401 = sphi 0, %s403
                  %p402 = scmp.ge.s32.totalorder %s401, %s394
                  %s406 = sphi 0, %s415
                  %s407 = sphi %s397, %s418
                  %s408 = sphi %s399, %s419
                $region72: #{_conv3x3_stride2_impl.1} parent=61 // loop_header_branch
                  %405 = sbr.rel (%p402) target = $region76
                $region73: #{_conv3x3_stride2_impl.1} parent=61 // loop_body
                  %v409 = vld [vmem:[%s407] sm:$0xff]
                  %410 = vst [vmem:[%s408] sm:$0xff] %v409
                  %v411 = vld [vmem:[%s407 + $0x120] sm:$0xff]
                  %412 = vst [vmem:[%s408 + $0x40] sm:$0xff] %v411
                  %s413 = sadd.s32 1, %s406
                  %p414 = scmp.ge.s32.totalorder %s413, %s394
                  %s415 = scalar_select %p414, 0, %s413
                  %s416 = smul.u32 %s415, 8
                  %s417 = smul.u32 %s415, 8
                  %s418 = scalar_lea.vmem %s397, %s416
                  %s419 = scalar_lea.vmem %s399, %s417 [#allocation4]
                $region74: #{_conv3x3_stride2_impl.1} parent=61 // loop_footer
                  %s403 = sadd.s32 %s401, 1
                $region75: #{_conv3x3_stride2_impl.1} parent=61 // loop_footer_branch
                  %400 = sbr.rel target = $region71
                $region76: #{_conv3x3_stride2_impl.1} parent=61 // loop_exit
                  _
              $region62: #{_conv3x3_stride2_impl.1} parent=39 // pred_fallthru
                _
              // Predicated region
              $region77: #{_conv3x3_stride2_impl.1} parent=39 // pred_check
                _
              $region78: #{_conv3x3_stride2_impl.1} parent=39 // pred_check_branch
                %421 = sbr.rel target = $region80
              $region79: #{_conv3x3_stride2_impl.1} parent=39 // pred_region
                _
              $region80: #{_conv3x3_stride2_impl.1} parent=39 // pred_fallthru
                _
            $region40: #{_conv3x3_stride2_impl.1} parent=35 // pred_fallthru
              _
            // Predicated region
            $region41: #{_conv3x3_stride2_impl.1} parent=35 // pred_check
              _
            $region42: #{_conv3x3_stride2_impl.1} parent=35 // pred_check_branch
              %263 = sbr.rel target = $region44
            $region43: #{_conv3x3_stride2_impl.1} parent=35 // pred_region
              %s265 = ssub.s32 256, 1
              %s266 = sshrl.u32 %s256, 3
              // While loop
              $region45: #{_conv3x3_stride2_impl.1} parent=43 // loop_pre_header
                _
              $region46: #{_conv3x3_stride2_impl.1} parent=43 // loop_header
                %s268 = sphi 0, %s270
                %p269 = scmp.ge.s32.totalorder %s268, %s266
                %s273 = sphi 0, %s310
                %s274 = sphi %s255, %s313
                %s275 = sphi %s243, %s314
              $region47: #{_conv3x3_stride2_impl.1} parent=43 // loop_header_branch
                %272 = sbr.rel (%p269) target = $region51
              $region48: #{_conv3x3_stride2_impl.1} parent=43 // loop_body
                %v276 = vld [vmem:[%s274] sm:%s265]
                %277 = vst [vmem:[%s275] sm:%s265] %v276
                %v278 = vld [vmem:[%s274 + $0x8] sm:%s265]
                %279 = vst [vmem:[%s275 + $0x8] sm:%s265] %v278
                %v280 = vld [vmem:[%s274 + $0x10] sm:%s265]
                %281 = vst [vmem:[%s275 + $0x10] sm:%s265] %v280
                %v282 = vld [vmem:[%s274 + $0x18] sm:%s265]
                %283 = vst [vmem:[%s275 + $0x18] sm:%s265] %v282
                %v284 = vld [vmem:[%s274 + $0x20] sm:%s265]
                %285 = vst [vmem:[%s275 + $0x20] sm:%s265] %v284
                %v286 = vld [vmem:[%s274 + $0x28] sm:%s265]
                %287 = vst [vmem:[%s275 + $0x28] sm:%s265] %v286
                %v288 = vld [vmem:[%s274 + $0x30] sm:%s265]
                %289 = vst [vmem:[%s275 + $0x30] sm:%s265] %v288
                %v290 = vld [vmem:[%s274 + $0x38] sm:%s265]
                %291 = vst [vmem:[%s275 + $0x38] sm:%s265] %v290
                %v292 = vld [vmem:[%s274 + $0x120] sm:%s265]
                %293 = vst [vmem:[%s275 + $0x40] sm:%s265] %v292
                %v294 = vld [vmem:[%s274 + $0x128] sm:%s265]
                %295 = vst [vmem:[%s275 + $0x48] sm:%s265] %v294
                %v296 = vld [vmem:[%s274 + $0x130] sm:%s265]
                %297 = vst [vmem:[%s275 + $0x50] sm:%s265] %v296
                %v298 = vld [vmem:[%s274 + $0x138] sm:%s265]
                %299 = vst [vmem:[%s275 + $0x58] sm:%s265] %v298
                %v300 = vld [vmem:[%s274 + $0x140] sm:%s265]
                %301 = vst [vmem:[%s275 + $0x60] sm:%s265] %v300
                %v302 = vld [vmem:[%s274 + $0x148] sm:%s265]
                %303 = vst [vmem:[%s275 + $0x68] sm:%s265] %v302
                %v304 = vld [vmem:[%s274 + $0x150] sm:%s265]
                %305 = vst [vmem:[%s275 + $0x70] sm:%s265] %v304
                %v306 = vld [vmem:[%s274 + $0x158] sm:%s265]
                %307 = vst [vmem:[%s275 + $0x78] sm:%s265] %v306
                %s308 = sadd.s32 1, %s273
                %p309 = scmp.ge.s32.totalorder %s308, %s266
                %s310 = scalar_select %p309, 0, %s308
                %s311 = smul.u32 %s310, 64
                %s312 = smul.u32 %s310, 64
                %s313 = scalar_lea.vmem %s255, %s311
                %s314 = scalar_lea.vmem %s243, %s312 [#allocation4]
              $region49: #{_conv3x3_stride2_impl.1} parent=43 // loop_footer
                %s270 = sadd.s32 %s268, 1
              $region50: #{_conv3x3_stride2_impl.1} parent=43 // loop_footer_branch
                %267 = sbr.rel target = $region46
              $region51: #{_conv3x3_stride2_impl.1} parent=43 // loop_exit
                _
              %s315 = sshrl.u32 %s256, 3
              %s316 = sand.u32 %s256, 7
              %s317 = smul.u32 %s315, 8
              %s318 = smul.u32 8, %s317
              %s319 = scalar_lea.vmem %s255, %s318
              %s320 = smul.u32 8, %s317
              %s321 = scalar_lea.vmem %s243, %s320 [#allocation4]
              // While loop
              $region52: #{_conv3x3_stride2_impl.1} parent=43 // loop_pre_header
                _
              $region53: #{_conv3x3_stride2_impl.1} parent=43 // loop_header
                %s323 = sphi 0, %s325
                %p324 = scmp.ge.s32.totalorder %s323, %s316
                %s328 = sphi 0, %s337
                %s329 = sphi %s319, %s340
                %s330 = sphi %s321, %s341
              $region54: #{_conv3x3_stride2_impl.1} parent=43 // loop_header_branch
                %327 = sbr.rel (%p324) target = $region58
              $region55: #{_conv3x3_stride2_impl.1} parent=43 // loop_body
                %v331 = vld [vmem:[%s329] sm:%s265]
                %332 = vst [vmem:[%s330] sm:%s265] %v331
                %v333 = vld [vmem:[%s329 + $0x120] sm:%s265]
                %334 = vst [vmem:[%s330 + $0x40] sm:%s265] %v333
                %s335 = sadd.s32 1, %s328
                %p336 = scmp.ge.s32.totalorder %s335, %s316
                %s337 = scalar_select %p336, 0, %s335
                %s338 = smul.u32 %s337, 8
                %s339 = smul.u32 %s337, 8
                %s340 = scalar_lea.vmem %s319, %s338
                %s341 = scalar_lea.vmem %s321, %s339 [#allocation4]
              $region56: #{_conv3x3_stride2_impl.1} parent=43 // loop_footer
                %s325 = sadd.s32 %s323, 1
              $region57: #{_conv3x3_stride2_impl.1} parent=43 // loop_footer_branch
                %322 = sbr.rel target = $region53
              $region58: #{_conv3x3_stride2_impl.1} parent=43 // loop_exit
                _
            $region44: #{_conv3x3_stride2_impl.1} parent=35 // pred_fallthru
              _
          $region36: #{_conv3x3_stride2_impl.1} parent=31 // pred_fallthru
            _
          %422 = vnop
        $region32: #{_conv3x3_stride2_impl.1} parent=27 // pred_fallthru
          _
        // Predicated region
        $region81: #{_conv3x3_stride2_impl.1} parent=27 // pred_check
          %p423 = pneg %p84
        $region82: #{_conv3x3_stride2_impl.1} parent=27 // pred_check_branch
          %425 = sbr.rel (%p423) target = $region84
        $region83: #{_conv3x3_stride2_impl.1} parent=27 // pred_region
          %s426 = sand.u32 %s74, 1
          %s427 = sand.u32 %s74, 1
          %s428 = smul.addr %s427, 32
          %s429 = scalar_lea.vmem [#allocation5], %s428
          %s430 = sadd.s32 %s20, 1
          %s431 = smul.u32 %s430, 4
          %s432 = smul.addr %s431, 2
          %s433 = smul.addr %s18, 18
          %s434 = sadd.s32 %s432, %s433
          %s435 = smul.addr %s434, 8
          %s436 = scalar_lea.vmem %s1, %s435
          // Predicated region
          $region85: #{_conv3x3_stride2_impl.1} parent=83 // pred_check
            _
          $region86: #{_conv3x3_stride2_impl.1} parent=83 // pred_check_branch
            %438 = sbr.rel (0) target = $region88
          $region87: #{_conv3x3_stride2_impl.1} parent=83 // pred_region
            // Predicated region
            $region89: #{_conv3x3_stride2_impl.1} parent=87 // pred_check
              _
            $region90: #{_conv3x3_stride2_impl.1} parent=87 // pred_check_branch
              %440 = sbr.rel (0) target = $region92
            $region91: #{_conv3x3_stride2_impl.1} parent=87 // pred_region
              // Predicated region
              $region104: #{_conv3x3_stride2_impl.1} parent=91 // pred_check
                _
              $region105: #{_conv3x3_stride2_impl.1} parent=91 // pred_check_branch
                %462 = sbr.rel (0) target = $region107
              $region106: #{_conv3x3_stride2_impl.1} parent=91 // pred_region
                loop: start=0, step=1, limit=1
                $region108: #{_conv3x3_stride2_impl.1} parent=106 // loop_pre_header
                  _
                $region109: #{_conv3x3_stride2_impl.1} parent=106 // loop_header
                  %s464 = sphi 0, %s468
                  %p465 = scmp.ge.s32.totalorder %s464, 1
                  %s469 = sphi %s436, %s436
                  %s470 = sphi %s429, %s429
                $region110: #{_conv3x3_stride2_impl.1} parent=106 // loop_header_branch
                  %467 = sbr.rel (%p465) target = $region114
                $region111: #{_conv3x3_stride2_impl.1} parent=106 // loop_body
                  %v471 = vld [vmem:[%s469] sm:$0xff]
                  %472 = vst [vmem:[%s470] sm:$0xff] %v471
                  %v473 = vld [vmem:[%s469 + $0x8] sm:$0xff]
                  %474 = vst [vmem:[%s470 + $0x8] sm:$0xff] %v473
                  %v475 = vld [vmem:[%s469 + $0x120] sm:$0xff]
                  %476 = vst [vmem:[%s470 + $0x10] sm:$0xff] %v475
                  %v477 = vld [vmem:[%s469 + $0x128] sm:$0xff]
                  %478 = vst [vmem:[%s470 + $0x18] sm:$0xff] %v477
                $region112: #{_conv3x3_stride2_impl.1} parent=106 // loop_footer
                  %s468 = sadd.s32 1, %s464
                $region113: #{_conv3x3_stride2_impl.1} parent=106 // loop_footer_branch
                  %463 = sbr.rel target = $region109
                $region114: #{_conv3x3_stride2_impl.1} parent=106 // loop_exit
                  _
              $region107: #{_conv3x3_stride2_impl.1} parent=91 // pred_fallthru
                _
              // Predicated region
              $region115: #{_conv3x3_stride2_impl.1} parent=91 // pred_check
                _
              $region116: #{_conv3x3_stride2_impl.1} parent=91 // pred_check_branch
                %480 = sbr.rel target = $region118
              $region117: #{_conv3x3_stride2_impl.1} parent=91 // pred_region
                _
              $region118: #{_conv3x3_stride2_impl.1} parent=91 // pred_fallthru
                _
            $region92: #{_conv3x3_stride2_impl.1} parent=87 // pred_fallthru
              _
            // Predicated region
            $region93: #{_conv3x3_stride2_impl.1} parent=87 // pred_check
              _
            $region94: #{_conv3x3_stride2_impl.1} parent=87 // pred_check_branch
              %442 = sbr.rel target = $region96
            $region95: #{_conv3x3_stride2_impl.1} parent=87 // pred_region
              %s444 = ssub.s32 256, 1
              loop: start=0, step=1, limit=1
              $region97: #{_conv3x3_stride2_impl.1} parent=95 // loop_pre_header
                _
              $region98: #{_conv3x3_stride2_impl.1} parent=95 // loop_header
                %s446 = sphi 0, %s450
                %p447 = scmp.ge.s32.totalorder %s446, 1
                %s451 = sphi %s436, %s436
                %s452 = sphi %s429, %s429
              $region99: #{_conv3x3_stride2_impl.1} parent=95 // loop_header_branch
                %449 = sbr.rel (%p447) target = $region103
              $region100: #{_conv3x3_stride2_impl.1} parent=95 // loop_body
                %v453 = vld [vmem:[%s451] sm:%s444]
                %454 = vst [vmem:[%s452] sm:%s444] %v453
                %v455 = vld [vmem:[%s451 + $0x8] sm:%s444]
                %456 = vst [vmem:[%s452 + $0x8] sm:%s444] %v455
                %v457 = vld [vmem:[%s451 + $0x120] sm:%s444]
                %458 = vst [vmem:[%s452 + $0x10] sm:%s444] %v457
                %v459 = vld [vmem:[%s451 + $0x128] sm:%s444]
                %460 = vst [vmem:[%s452 + $0x18] sm:%s444] %v459
              $region101: #{_conv3x3_stride2_impl.1} parent=95 // loop_footer
                %s450 = sadd.s32 1, %s446
              $region102: #{_conv3x3_stride2_impl.1} parent=95 // loop_footer_branch
                %445 = sbr.rel target = $region98
              $region103: #{_conv3x3_stride2_impl.1} parent=95 // loop_exit
                _
            $region96: #{_conv3x3_stride2_impl.1} parent=87 // pred_fallthru
              _
          $region88: #{_conv3x3_stride2_impl.1} parent=83 // pred_fallthru
            _
          %481 = vnop
        $region84: #{_conv3x3_stride2_impl.1} parent=27 // pred_fallthru
          _
      $region28: #{_conv3x3_stride2_impl.1} parent=5 // pred_fallthru
        _
      %p482 = scmp.le.s32.totalorder 1, %s11
      %p483 = scmp.lt.s32.totalorder %s11, 5
      %p484 = pnand %p482, %p483
      %p485 = pneg %p484
      // Predicated region
      $region119: #{_conv3x3_stride2_impl.1} parent=5 // pred_check
        _
      $region120: #{_conv3x3_stride2_impl.1} parent=5 // pred_check_branch
        %487 = sbr.rel (%p484) target = $region122
      $region121: #{_conv3x3_stride2_impl.1} parent=5 // pred_region
        %s488 = ssub.s32 %s11, 1
        %s489 = sand.u32 %s45, 1
        %s490 = sand.u32 %s45, 1
        %s491 = smul.addr %s490, 128
        %s492 = scalar_lea.vmem [#allocation4], %s491
        // Predicated region
        $region123: #{_conv3x3_stride2_impl.1} parent=121 // pred_check
          %p493 = pneg %p58
        $region124: #{_conv3x3_stride2_impl.1} parent=121 // pred_check_branch
          %495 = sbr.rel (%p493) target = $region126
        $region125: #{_conv3x3_stride2_impl.1} parent=121 // pred_region
          _
        $region126: #{_conv3x3_stride2_impl.1} parent=121 // pred_fallthru
          _
        %s496 = sand.u32 %s77, 1
        %s497 = sand.u32 %s77, 1
        %s498 = smul.addr %s497, 32
        %s499 = scalar_lea.vmem [#allocation5], %s498
        // Predicated region
        $region127: #{_conv3x3_stride2_impl.1} parent=121 // pred_check
          %p500 = pneg %p90
        $region128: #{_conv3x3_stride2_impl.1} parent=121 // pred_check_branch
          %502 = sbr.rel (%p500) target = $region130
        $region129: #{_conv3x3_stride2_impl.1} parent=121 // pred_region
          _
        $region130: #{_conv3x3_stride2_impl.1} parent=121 // pred_fallthru
          _
        %s503 = sand.u32 %s45, 1
        %s504 = sand.u32 %s45, 1
        %s505 = smul.addr %s504, 128
        %s506 = scalar_lea.vmem [#allocation4], %s505
        %p507 = pneg %p58
        %p508 = pneg %p55
        %s509 = sand.u32 %s77, 1
        %s510 = sand.u32 %s77, 1
        %s511 = smul.addr %s510, 32
        %s512 = scalar_lea.vmem [#allocation5], %s511
        %p513 = pneg %p90
        %p514 = pneg %p87
        %p515 = scmp.lt.s32.totalorder %s22, 0
        %s516 = scalar_select %p515, %s22, 0
        %s517 = smul.addr %s516, 8
        %s518 = scalar_lea.vmem %s2, %s517
        %p519 = pneg %p116
        %p520 = pneg %p113
        %p521 = scmp.lt.s32.totalorder %s22, 0
        %s522 = scalar_select %p521, %s22, 0
        %s523 = smul.addr %s522, 4
        %s524 = scalar_lea.vmem %s3, %s523
        %p525 = pneg %p142
        %p526 = pneg %p139
        %p527 = scmp.lt.s32.totalorder %s22, 0
        %s528 = scalar_select %p527, %s22, 0
        %s529 = scalar_lea.vmem %s4, %s528
        %p530 = pneg %p168
        %p531 = pneg %p165
        %p532 = pneg %p198
        %p533 = pneg %p195
        %s534 = smul.u32 4, %s23
        %p535 = scmp.lt.s32.totalorder %s21, 1
        %s536 = scalar_select %p535, %s21, 1
        %p537 = scmp.lt.s32.totalorder %s534, 7
        %s538 = scalar_select %p537, %s534, 7
        %p539 = scmp.lt.s32.totalorder %s22, 0
        %s540 = scalar_select %p539, %s22, 0
        %s541 = sadd.s32 %s540, %s538
        %s542 = smul.addr %s536, 8
        %s543 = sadd.s32 %s541, %s542
        %s544 = smul.addr %s543, 8
        %s545 = scalar_lea.vmem %s5, %s544
        %s546 = smul.u32 4, %s23
        %s547 = ssub.s32 9, %s546
        %p548 = scmp.lt.s32.totalorder %s547, 4
        %s549 = scalar_select %p548, %s547, 4
        %s550 = smul.u32 256, %s549
        %s551 = smul.u32 %s550, 2
        %s552 = sadd.s32 %s23, 1
        %s553 = smul.u32 %s552, 4
        %p554 = scmp.lt.s32.totalorder %s22, 0
        %s555 = scalar_select %p554, %s22, 0
        %s556 = smul.addr %s555, 8
        %s557 = scalar_lea.vmem %s2, %s556
        %p558 = scmp.lt.s32.totalorder %s22, 0
        %s559 = scalar_select %p558, %s22, 0
        %s560 = smul.addr %s559, 4
        %s561 = scalar_lea.vmem %s3, %s560
        %p562 = scmp.lt.s32.totalorder %s22, 0
        %s563 = scalar_select %p562, %s22, 0
        %s564 = scalar_lea.vmem %s4, %s563
        %s565 = smul.u32 4, %s23
        %p566 = scmp.lt.s32.totalorder %s21, 1
        %s567 = scalar_select %p566, %s21, 1
        %p568 = scmp.lt.s32.totalorder %s565, 7
        %s569 = scalar_select %p568, %s565, 7
        %p570 = scmp.lt.s32.totalorder %s22, 0
        %s571 = scalar_select %p570, %s22, 0
        %s572 = sadd.s32 %s571, %s569
        %s573 = smul.addr %s567, 8
        %s574 = sadd.s32 %s572, %s573
        %s575 = smul.addr %s574, 8
        %s576 = scalar_lea.vmem %s5, %s575
        %s577 = smul.u32 4, %s23
        %v578 = vld [vmem:[%s564] sm:$0x1]
        %v579 = vld [vmem:[%s492] sm:$0xff]
        %v580 = vld [vmem:[%s492 + $0x8] sm:$0xff]
        %v581 = vld [vmem:[%s492 + $0x10] sm:$0xff]
        %v582 = vld [vmem:[%s492 + $0x18] sm:$0xff]
        %v583 = vld [vmem:[%s492 + $0x20] sm:$0xff]
        %v584 = vld [vmem:[%s492 + $0x28] sm:$0xff]
        %v585 = vld [vmem:[%s492 + $0x30] sm:$0xff]
        %v586 = vld [vmem:[%s492 + $0x38] sm:$0xff]
        %s587 = scalar_lea.vmem %s492, 64 [#allocation4]
        %v588 = vld [vmem:[%s587] sm:$0xff]
        %v589 = vld [vmem:[%s587 + $0x8] sm:$0xff]
        %v590 = vld [vmem:[%s587 + $0x10] sm:$0xff]
        %v591 = vld [vmem:[%s587 + $0x18] sm:$0xff]
        %v592 = vld [vmem:[%s587 + $0x20] sm:$0xff]
        %v593 = vld [vmem:[%s587 + $0x28] sm:$0xff]
        %v594 = vld [vmem:[%s587 + $0x30] sm:$0xff]
        %v595 = vld [vmem:[%s587 + $0x38] sm:$0xff]
        %v596 = vld [vmem:[%s557] sm:$0xff]
        %s597 = scalar_lea.vmem %s557, 8
        %v598 = vld [vmem:[%s597] sm:$0xff]
        %vm599 = vcmask 64512
        %v601 = vsel %vm599, %v588, 0
        %v604 = vsel %vm599, %v589, 0
        %v607 = vsel %vm599, %v590, 0
        %v610 = vsel %vm599, %v591, 0
        %v613 = vsel %vm599, %v592, 0
        %v616 = vsel %vm599, %v593, 0
        %v619 = vsel %vm599, %v594, 0
        %v622 = vsel %vm599, %v595, 0
        %624 = vmatprep.subr.mxu0 0.0
        %625 = vmatpush1.msra.mxu0 0.0
        %626 = vmatprep.subr.mxu0 0.0
        %627 = vmatpush1.msra.mxu0 0.0
        %628 = vmatprep.subr.mxu0 0.0
        %629 = vmatpush1.msra.mxu0 0.0
        %630 = vmatprep.subr.mxu0 0.0
        %631 = vmatpush1.msra.mxu0 0.0
        %632 = vmatprep.subr.mxu0 0.0
        %633 = vmatpush1.msra.mxu0 0.0
        %634 = vmatprep.subr.mxu0 0.0
        %635 = vmatpush1.msra.mxu0 0.0
        %636 = vmatprep.subr.mxu0 0.0
        %637 = vmatpush1.msra.mxu0 0.0
        %638 = vmatprep.subr.mxu0 0.0
        %639 = vmatpush1.msra.mxu0 0.0
        %640 = vmatprep.subr.mxu0 0.0
        %641 = vmatpush1.msra.mxu0 0.0
        %642 = vmatprep.subr.mxu0 0.0
        %643 = vmatpush1.msra.mxu0 0.0
        %644 = vmatprep.subr.mxu0 0.0
        %645 = vmatpush1.msra.mxu0 0.0
        %646 = vmatprep.subr.mxu0 0.0
        %647 = vmatpush1.msra.mxu0 0.0
        %648 = vmatprep.subr.mxu0 0.0
        %649 = vmatpush1.msra.mxu0 0.0
        %650 = vmatprep.subr.mxu0 0.0
        %651 = vmatpush1.msra.mxu0 0.0
        %652 = vmatprep.subr.mxu0 0.0
        %653 = vmatpush1.msra.mxu0 0.0
        %654 = vmatprep.subr.mxu0 0.0
        %655 = vmatpush1.msra.mxu0 %v598
        %656 = vmatprep.subr.mxu0 0.0
        %657 = vmatpush2.msra.mxu0 0.0
        %658 = vmatprep.subr.mxu0 0.0
        %659 = vmatpush2.msra.mxu0 0.0
        %660 = vmatprep.subr.mxu0 0.0
        %661 = vmatpush2.msra.mxu0 0.0
        %662 = vmatprep.subr.mxu0 0.0
        %663 = vmatpush2.msra.mxu0 0.0
        %664 = vmatprep.subr.mxu0 0.0
        %665 = vmatpush2.msra.mxu0 0.0
        %666 = vmatprep.subr.mxu0 0.0
        %667 = vmatpush2.msra.mxu0 0.0
        %668 = vmatprep.subr.mxu0 0.0
        %669 = vmatpush2.msra.mxu0 0.0
        %670 = vmatprep.subr.mxu0 0.0
        %671 = vmatpush2.msra.mxu0 0.0
        %672 = vmatprep.subr.mxu0 0.0
        %673 = vmatpush2.msra.mxu0 0.0
        %674 = vmatprep.subr.mxu0 0.0
        %675 = vmatpush2.msra.mxu0 0.0
        %676 = vmatprep.subr.mxu0 0.0
        %677 = vmatpush2.msra.mxu0 0.0
        %678 = vmatprep.subr.mxu0 0.0
        %679 = vmatpush2.msra.mxu0 0.0
        %680 = vmatprep.subr.mxu0 0.0
        %681 = vmatpush2.msra.mxu0 0.0
        %682 = vmatprep.subr.mxu0 0.0
        %683 = vmatpush2.msra.mxu0 0.0
        %684 = vmatprep.subr.mxu0 0.0
        %685 = vmatpush2.msra.mxu0 0.0
        %686 = vmatprep.subr.mxu0 0.0
        %687 = vmatpush2.msra.mxu0 0.0
        %688 = vmatprep.mubr.f32.mxu0 0.0
        %689 = vmatmul.mubr.f32.gmra.mxu0 %v601
        %v690 = vpop.f32.mrf.mxu0
        %v691 = vadd.f32 0.0, %v690
        %v692 = vpop.f32.mrf.mxu0
        %693 = vmatprep.mubr.f32.mxu0 0.0
        %694 = vmatmul.mubr.f32.gmra.mxu0 %v604
        %v695 = vpop.f32.mrf.mxu0
        %v696 = vadd.f32 0.0, %v695
        %v697 = vpop.f32.mrf.mxu0
        %698 = vmatprep.mubr.f32.mxu0 0.0
        %699 = vmatmul.mubr.f32.gmra.mxu0 %v607
        %v700 = vpop.f32.mrf.mxu0
        %v701 = vadd.f32 0.0, %v700
        %v702 = vpop.f32.mrf.mxu0
        %703 = vmatprep.mubr.f32.mxu0 0.0
        %704 = vmatmul.mubr.f32.gmra.mxu0 %v610
        %v705 = vpop.f32.mrf.mxu0
        %v706 = vadd.f32 0.0, %v705
        %v707 = vpop.f32.mrf.mxu0
        %708 = vmatprep.mubr.f32.mxu0 0.0
        %709 = vmatmul.mubr.f32.gmra.mxu0 %v613
        %v710 = vpop.f32.mrf.mxu0
        %v711 = vadd.f32 0.0, %v710
        %v712 = vpop.f32.mrf.mxu0
        %713 = vmatprep.mubr.f32.mxu0 0.0
        %714 = vmatmul.mubr.f32.gmra.mxu0 %v616
        %v715 = vpop.f32.mrf.mxu0
        %v716 = vadd.f32 0.0, %v715
        %v717 = vpop.f32.mrf.mxu0
        %718 = vmatprep.mubr.f32.mxu0 0.0
        %719 = vmatmul.mubr.f32.gmra.mxu0 %v619
        %v720 = vpop.f32.mrf.mxu0
        %v721 = vadd.f32 0.0, %v720
        %v722 = vpop.f32.mrf.mxu0
        %723 = vmatprep.mubr.f32.mxu0 0.0
        %724 = vmatmul.mubr.f32.gmra.mxu0 %v622
        %v725 = vpop.f32.mrf.mxu0
        %v726 = vadd.f32 0.0, %v725
        %v727 = vpop.f32.mrf.mxu0
        %728 = vdwg.mxu0
        %v730 = vsel %vm599, %v579, 0
        %v733 = vsel %vm599, %v580, 0
        %v736 = vsel %vm599, %v581, 0
        %v739 = vsel %vm599, %v582, 0
        %v742 = vsel %vm599, %v583, 0
        %v745 = vsel %vm599, %v584, 0
        %v748 = vsel %vm599, %v585, 0
        %v751 = vsel %vm599, %v586, 0
        %753 = vmatprep.subr.mxu0 0.0
        %754 = vmatpush1.msra.mxu0 0.0
        %755 = vmatprep.subr.mxu0 0.0
        %756 = vmatpush1.msra.mxu0 0.0
        %757 = vmatprep.subr.mxu0 0.0
        %758 = vmatpush1.msra.mxu0 0.0
        %759 = vmatprep.subr.mxu0 0.0
        %760 = vmatpush1.msra.mxu0 0.0
        %761 = vmatprep.subr.mxu0 0.0
        %762 = vmatpush1.msra.mxu0 0.0
        %763 = vmatprep.subr.mxu0 0.0
        %764 = vmatpush1.msra.mxu0 0.0
        %765 = vmatprep.subr.mxu0 0.0
        %766 = vmatpush1.msra.mxu0 0.0
        %767 = vmatprep.subr.mxu0 0.0
        %768 = vmatpush1.msra.mxu0 0.0
        %769 = vmatprep.subr.mxu0 0.0
        %770 = vmatpush1.msra.mxu0 0.0
        %771 = vmatprep.subr.mxu0 0.0
        %772 = vmatpush1.msra.mxu0 0.0
        %773 = vmatprep.subr.mxu0 0.0
        %774 = vmatpush1.msra.mxu0 0.0
        %775 = vmatprep.subr.mxu0 0.0
        %776 = vmatpush1.msra.mxu0 0.0
        %777 = vmatprep.subr.mxu0 0.0
        %778 = vmatpush1.msra.mxu0 0.0
        %779 = vmatprep.subr.mxu0 0.0
        %780 = vmatpush1.msra.mxu0 0.0
        %781 = vmatprep.subr.mxu0 0.0
        %782 = vmatpush1.msra.mxu0 0.0
        %783 = vmatprep.subr.mxu0 0.0
        %784 = vmatpush1.msra.mxu0 %v596
        %785 = vmatprep.subr.mxu0 0.0
        %786 = vmatpush2.msra.mxu0 0.0
        %787 = vmatprep.subr.mxu0 0.0
        %788 = vmatpush2.msra.mxu0 0.0
        %789 = vmatprep.subr.mxu0 0.0
        %790 = vmatpush2.msra.mxu0 0.0
        %791 = vmatprep.subr.mxu0 0.0
        %792 = vmatpush2.msra.mxu0 0.0
        %793 = vmatprep.subr.mxu0 0.0
        %794 = vmatpush2.msra.mxu0 0.0
        %795 = vmatprep.subr.mxu0 0.0
        %796 = vmatpush2.msra.mxu0 0.0
        %797 = vmatprep.subr.mxu0 0.0
        %798 = vmatpush2.msra.mxu0 0.0
        %799 = vmatprep.subr.mxu0 0.0
        %800 = vmatpush2.msra.mxu0 0.0
        %801 = vmatprep.subr.mxu0 0.0
        %802 = vmatpush2.msra.mxu0 0.0
        %803 = vmatprep.subr.mxu0 0.0
        %804 = vmatpush2.msra.mxu0 0.0
        %805 = vmatprep.subr.mxu0 0.0
        %806 = vmatpush2.msra.mxu0 0.0
        %807 = vmatprep.subr.mxu0 0.0
        %808 = vmatpush2.msra.mxu0 0.0
        %809 = vmatprep.subr.mxu0 0.0
        %810 = vmatpush2.msra.mxu0 0.0
        %811 = vmatprep.subr.mxu0 0.0
        %812 = vmatpush2.msra.mxu0 0.0
        %813 = vmatprep.subr.mxu0 0.0
        %814 = vmatpush2.msra.mxu0 0.0
        %815 = vmatprep.subr.mxu0 0.0
        %816 = vmatpush2.msra.mxu0 0.0
        %817 = vmatprep.mubr.f32.mxu0 0.0
        %818 = vmatmul.mubr.f32.gmra.mxu0 %v730
        %v819 = vpop.f32.mrf.mxu0
        %v820 = vadd.f32 %v691, %v819
        %v821 = vpop.f32.mrf.mxu0
        %822 = vmatprep.mubr.f32.mxu0 0.0
        %823 = vmatmul.mubr.f32.gmra.mxu0 %v733
        %v824 = vpop.f32.mrf.mxu0
        %v825 = vadd.f32 %v696, %v824
        %v826 = vpop.f32.mrf.mxu0
        %827 = vmatprep.mubr.f32.mxu0 0.0
        %828 = vmatmul.mubr.f32.gmra.mxu0 %v736
        %v829 = vpop.f32.mrf.mxu0
        %v830 = vadd.f32 %v701, %v829
        %v831 = vpop.f32.mrf.mxu0
        %832 = vmatprep.mubr.f32.mxu0 0.0
        %833 = vmatmul.mubr.f32.gmra.mxu0 %v739
        %v834 = vpop.f32.mrf.mxu0
        %v835 = vadd.f32 %v706, %v834
        %v836 = vpop.f32.mrf.mxu0
        %837 = vmatprep.mubr.f32.mxu0 0.0
        %838 = vmatmul.mubr.f32.gmra.mxu0 %v742
        %v839 = vpop.f32.mrf.mxu0
        %v840 = vadd.f32 %v711, %v839
        %v841 = vpop.f32.mrf.mxu0
        %842 = vmatprep.mubr.f32.mxu0 0.0
        %843 = vmatmul.mubr.f32.gmra.mxu0 %v745
        %v844 = vpop.f32.mrf.mxu0
        %v845 = vadd.f32 %v716, %v844
        %v846 = vpop.f32.mrf.mxu0
        %847 = vmatprep.mubr.f32.mxu0 0.0
        %848 = vmatmul.mubr.f32.gmra.mxu0 %v748
        %v849 = vpop.f32.mrf.mxu0
        %v850 = vadd.f32 %v721, %v849
        %v851 = vpop.f32.mrf.mxu0
        %852 = vmatprep.mubr.f32.mxu0 0.0
        %853 = vmatmul.mubr.f32.gmra.mxu0 %v751
        %v854 = vpop.f32.mrf.mxu0
        %v855 = vadd.f32 %v726, %v854
        %v856 = vpop.f32.mrf.mxu0
        %857 = vdwg.mxu0
        %v859 = vlaneseq
        %v860 = vshrl.u32 %v859, 7
        %v861 = vsub.s32 0, %v860
        %v862 = vrot.slane %v578, %v861
        %v864 = vadd.f32 %v820, %v862
        %v865 = vadd.f32 %v825, %v862
        %v866 = vadd.f32 %v830, %v862
        %v867 = vadd.f32 %v835, %v862
        %v868 = vadd.f32 %v840, %v862
        %v869 = vadd.f32 %v845, %v862
        %v870 = vadd.f32 %v850, %v862
        %v871 = vadd.f32 %v855, %v862
        %872 = vst.msk [vmem:[#allocation2] sm:$0xff] %vm599, %v864
        %873 = vst.msk [vmem:[#allocation2 + $0x8] sm:$0xff] %vm599, %v865
        %874 = vst.msk [vmem:[#allocation2 + $0x10] sm:$0xff] %vm599, %v866
        %875 = vst.msk [vmem:[#allocation2 + $0x18] sm:$0xff] %vm599, %v867
        %876 = vst.msk [vmem:[#allocation2 + $0x20] sm:$0xff] %vm599, %v868
        %877 = vst.msk [vmem:[#allocation2 + $0x28] sm:$0xff] %vm599, %v869
        %878 = vst.msk [vmem:[#allocation2 + $0x30] sm:$0xff] %vm599, %v870
        %879 = vst.msk [vmem:[#allocation2 + $0x38] sm:$0xff] %vm599, %v871
        %v880 = vld [vmem:[%s561] sm:$0xf]
        %s881 = scalar_lea.vmem %s561, 4
        %v882 = vld [vmem:[%s881] sm:$0xf]
        %vm883 = vcmask 31744
        %v884 = vsel %vm883, %v588, 0
        %v886 = vsel %vm883, %v589, 0
        %v888 = vsel %vm883, %v590, 0
        %v890 = vsel %vm883, %v591, 0
        %v892 = vsel %vm883, %v592, 0
        %v894 = vsel %vm883, %v593, 0
        %v896 = vsel %vm883, %v594, 0
        %v898 = vsel %vm883, %v595, 0
        %vm900 = vcmask 1043456
        %v902 = vsel %vm900, %v882, 0
        %904 = vmatprep.subr.mxu0 0.0
        %905 = vmatpush1.msra.mxu0 0.0
        %906 = vmatprep.subr.mxu0 0.0
        %907 = vmatpush1.msra.mxu0 0.0
        %908 = vmatprep.subr.mxu0 0.0
        %909 = vmatpush1.msra.mxu0 0.0
        %910 = vmatprep.subr.mxu0 0.0
        %911 = vmatpush1.msra.mxu0 0.0
        %912 = vmatprep.subr.mxu0 0.0
        %913 = vmatpush1.msra.mxu0 0.0
        %914 = vmatprep.subr.mxu0 0.0
        %915 = vmatpush1.msra.mxu0 0.0
        %916 = vmatprep.subr.mxu0 0.0
        %917 = vmatpush1.msra.mxu0 0.0
        %918 = vmatprep.subr.mxu0 0.0
        %919 = vmatpush1.msra.mxu0 0.0
        %920 = vmatprep.subr.mxu0 0.0
        %921 = vmatpush1.msra.mxu0 0.0
        %922 = vmatprep.subr.mxu0 0.0
        %923 = vmatpush1.msra.mxu0 0.0
        %924 = vmatprep.subr.mxu0 0.0
        %925 = vmatpush1.msra.mxu0 0.0
        %926 = vmatprep.subr.mxu0 0.0
        %927 = vmatpush1.msra.mxu0 0.0
        %928 = vmatprep.subr.mxu0 0.0
        %929 = vmatpush1.msra.mxu0 0.0
        %930 = vmatprep.subr.mxu0 0.0
        %931 = vmatpush1.msra.mxu0 0.0
        %932 = vmatprep.subr.mxu0 0.0
        %933 = vmatpush1.msra.mxu0 0.0
        %934 = vmatprep.subr.mxu0 0.0
        %935 = vmatpush1.msra.mxu0 %v902
        %936 = vmatprep.subr.mxu0 0.0
        %937 = vmatpush2.msra.mxu0 0.0
        %938 = vmatprep.subr.mxu0 0.0
        %939 = vmatpush2.msra.mxu0 0.0
        %940 = vmatprep.subr.mxu0 0.0
        %941 = vmatpush2.msra.mxu0 0.0
        %942 = vmatprep.subr.mxu0 0.0
        %943 = vmatpush2.msra.mxu0 0.0
        %944 = vmatprep.subr.mxu0 0.0
        %945 = vmatpush2.msra.mxu0 0.0
        %946 = vmatprep.subr.mxu0 0.0
        %947 = vmatpush2.msra.mxu0 0.0
        %948 = vmatprep.subr.mxu0 0.0
        %949 = vmatpush2.msra.mxu0 0.0
        %950 = vmatprep.subr.mxu0 0.0
        %951 = vmatpush2.msra.mxu0 0.0
        %952 = vmatprep.subr.mxu0 0.0
        %953 = vmatpush2.msra.mxu0 0.0
        %954 = vmatprep.subr.mxu0 0.0
        %955 = vmatpush2.msra.mxu0 0.0
        %956 = vmatprep.subr.mxu0 0.0
        %957 = vmatpush2.msra.mxu0 0.0
        %958 = vmatprep.subr.mxu0 0.0
        %959 = vmatpush2.msra.mxu0 0.0
        %960 = vmatprep.subr.mxu0 0.0
        %961 = vmatpush2.msra.mxu0 0.0
        %962 = vmatprep.subr.mxu0 0.0
        %963 = vmatpush2.msra.mxu0 0.0
        %964 = vmatprep.subr.mxu0 0.0
        %965 = vmatpush2.msra.mxu0 0.0
        %966 = vmatprep.subr.mxu0 0.0
        %967 = vmatpush2.msra.mxu0 0.0
        %968 = vmatprep.mubr.f32.mxu0 0.0
        %969 = vmatmul.mubr.f32.gmra.mxu0 %v884
        %v970 = vpop.f32.mrf.mxu0
        %v971 = vadd.f32 0.0, %v970
        %v972 = vpop.f32.mrf.mxu0
        %973 = vmatprep.mubr.f32.mxu0 0.0
        %974 = vmatmul.mubr.f32.gmra.mxu0 %v886
        %v975 = vpop.f32.mrf.mxu0
        %v976 = vadd.f32 0.0, %v975
        %v977 = vpop.f32.mrf.mxu0
        %978 = vmatprep.mubr.f32.mxu0 0.0
        %979 = vmatmul.mubr.f32.gmra.mxu0 %v888
        %v980 = vpop.f32.mrf.mxu0
        %v981 = vadd.f32 0.0, %v980
        %v982 = vpop.f32.mrf.mxu0
        %983 = vmatprep.mubr.f32.mxu0 0.0
        %984 = vmatmul.mubr.f32.gmra.mxu0 %v890
        %v985 = vpop.f32.mrf.mxu0
        %v986 = vadd.f32 0.0, %v985
        %v987 = vpop.f32.mrf.mxu0
        %988 = vmatprep.mubr.f32.mxu0 0.0
        %989 = vmatmul.mubr.f32.gmra.mxu0 %v892
        %v990 = vpop.f32.mrf.mxu0
        %v991 = vadd.f32 0.0, %v990
        %v992 = vpop.f32.mrf.mxu0
        %993 = vmatprep.mubr.f32.mxu0 0.0
        %994 = vmatmul.mubr.f32.gmra.mxu0 %v894
        %v995 = vpop.f32.mrf.mxu0
        %v996 = vadd.f32 0.0, %v995
        %v997 = vpop.f32.mrf.mxu0
        %998 = vmatprep.mubr.f32.mxu0 0.0
        %999 = vmatmul.mubr.f32.gmra.mxu0 %v896
        %v1000 = vpop.f32.mrf.mxu0
        %v1001 = vadd.f32 0.0, %v1000
        %v1002 = vpop.f32.mrf.mxu0
        %1003 = vmatprep.mubr.f32.mxu0 0.0
        %1004 = vmatmul.mubr.f32.gmra.mxu0 %v898
        %v1005 = vpop.f32.mrf.mxu0
        %v1006 = vadd.f32 0.0, %v1005
        %v1007 = vpop.f32.mrf.mxu0
        %1008 = vdwg.mxu0
        %v1009 = vsel %vm883, %v579, 0
        %v1011 = vsel %vm883, %v580, 0
        %v1013 = vsel %vm883, %v581, 0
        %v1015 = vsel %vm883, %v582, 0
        %v1017 = vsel %vm883, %v583, 0
        %v1019 = vsel %vm883, %v584, 0
        %v1021 = vsel %vm883, %v585, 0
        %v1023 = vsel %vm883, %v586, 0
        %v1026 = vsel %vm900, %v880, 0
        %1028 = vmatprep.subr.mxu0 0.0
        %1029 = vmatpush1.msra.mxu0 0.0
        %1030 = vmatprep.subr.mxu0 0.0
        %1031 = vmatpush1.msra.mxu0 0.0
        %1032 = vmatprep.subr.mxu0 0.0
        %1033 = vmatpush1.msra.mxu0 0.0
        %1034 = vmatprep.subr.mxu0 0.0
        %1035 = vmatpush1.msra.mxu0 0.0
        %1036 = vmatprep.subr.mxu0 0.0
        %1037 = vmatpush1.msra.mxu0 0.0
        %1038 = vmatprep.subr.mxu0 0.0
        %1039 = vmatpush1.msra.mxu0 0.0
        %1040 = vmatprep.subr.mxu0 0.0
        %1041 = vmatpush1.msra.mxu0 0.0
        %1042 = vmatprep.subr.mxu0 0.0
        %1043 = vmatpush1.msra.mxu0 0.0
        %1044 = vmatprep.subr.mxu0 0.0
        %1045 = vmatpush1.msra.mxu0 0.0
        %1046 = vmatprep.subr.mxu0 0.0
        %1047 = vmatpush1.msra.mxu0 0.0
        %1048 = vmatprep.subr.mxu0 0.0
        %1049 = vmatpush1.msra.mxu0 0.0
        %1050 = vmatprep.subr.mxu0 0.0
        %1051 = vmatpush1.msra.mxu0 0.0
        %1052 = vmatprep.subr.mxu0 0.0
        %1053 = vmatpush1.msra.mxu0 0.0
        %1054 = vmatprep.subr.mxu0 0.0
        %1055 = vmatpush1.msra.mxu0 0.0
        %1056 = vmatprep.subr.mxu0 0.0
        %1057 = vmatpush1.msra.mxu0 0.0
        %1058 = vmatprep.subr.mxu0 0.0
        %1059 = vmatpush1.msra.mxu0 %v1026
        %1060 = vmatprep.subr.mxu0 0.0
        %1061 = vmatpush2.msra.mxu0 0.0
        %1062 = vmatprep.subr.mxu0 0.0
        %1063 = vmatpush2.msra.mxu0 0.0
        %1064 = vmatprep.subr.mxu0 0.0
        %1065 = vmatpush2.msra.mxu0 0.0
        %1066 = vmatprep.subr.mxu0 0.0
        %1067 = vmatpush2.msra.mxu0 0.0
        %1068 = vmatprep.subr.mxu0 0.0
        %1069 = vmatpush2.msra.mxu0 0.0
        %1070 = vmatprep.subr.mxu0 0.0
        %1071 = vmatpush2.msra.mxu0 0.0
        %1072 = vmatprep.subr.mxu0 0.0
        %1073 = vmatpush2.msra.mxu0 0.0
        %1074 = vmatprep.subr.mxu0 0.0
        %1075 = vmatpush2.msra.mxu0 0.0
        %1076 = vmatprep.subr.mxu0 0.0
        %1077 = vmatpush2.msra.mxu0 0.0
        %1078 = vmatprep.subr.mxu0 0.0
        %1079 = vmatpush2.msra.mxu0 0.0
        %1080 = vmatprep.subr.mxu0 0.0
        %1081 = vmatpush2.msra.mxu0 0.0
        %1082 = vmatprep.subr.mxu0 0.0
        %1083 = vmatpush2.msra.mxu0 0.0
        %1084 = vmatprep.subr.mxu0 0.0
        %1085 = vmatpush2.msra.mxu0 0.0
        %1086 = vmatprep.subr.mxu0 0.0
        %1087 = vmatpush2.msra.mxu0 0.0
        %1088 = vmatprep.subr.mxu0 0.0
        %1089 = vmatpush2.msra.mxu0 0.0
        %1090 = vmatprep.subr.mxu0 0.0
        %1091 = vmatpush2.msra.mxu0 0.0
        %1092 = vmatprep.mubr.f32.mxu0 0.0
        %1093 = vmatmul.mubr.f32.gmra.mxu0 %v1009
        %v1094 = vpop.f32.mrf.mxu0
        %v1095 = vadd.f32 %v971, %v1094
        %v1096 = vpop.f32.mrf.mxu0
        %1097 = vmatprep.mubr.f32.mxu0 0.0
        %1098 = vmatmul.mubr.f32.gmra.mxu0 %v1011
        %v1099 = vpop.f32.mrf.mxu0
        %v1100 = vadd.f32 %v976, %v1099
        %v1101 = vpop.f32.mrf.mxu0
        %1102 = vmatprep.mubr.f32.mxu0 0.0
        %1103 = vmatmul.mubr.f32.gmra.mxu0 %v1013
        %v1104 = vpop.f32.mrf.mxu0
        %v1105 = vadd.f32 %v981, %v1104
        %v1106 = vpop.f32.mrf.mxu0
        %1107 = vmatprep.mubr.f32.mxu0 0.0
        %1108 = vmatmul.mubr.f32.gmra.mxu0 %v1015
        %v1109 = vpop.f32.mrf.mxu0
        %v1110 = vadd.f32 %v986, %v1109
        %v1111 = vpop.f32.mrf.mxu0
        %1112 = vmatprep.mubr.f32.mxu0 0.0
        %1113 = vmatmul.mubr.f32.gmra.mxu0 %v1017
        %v1114 = vpop.f32.mrf.mxu0
        %v1115 = vadd.f32 %v991, %v1114
        %v1116 = vpop.f32.mrf.mxu0
        %1117 = vmatprep.mubr.f32.mxu0 0.0
        %1118 = vmatmul.mubr.f32.gmra.mxu0 %v1019
        %v1119 = vpop.f32.mrf.mxu0
        %v1120 = vadd.f32 %v996, %v1119
        %v1121 = vpop.f32.mrf.mxu0
        %1122 = vmatprep.mubr.f32.mxu0 0.0
        %1123 = vmatmul.mubr.f32.gmra.mxu0 %v1021
        %v1124 = vpop.f32.mrf.mxu0
        %v1125 = vadd.f32 %v1001, %v1124
        %v1126 = vpop.f32.mrf.mxu0
        %1127 = vmatprep.mubr.f32.mxu0 0.0
        %1128 = vmatmul.mubr.f32.gmra.mxu0 %v1023
        %v1129 = vpop.f32.mrf.mxu0
        %v1130 = vadd.f32 %v1006, %v1129
        %v1131 = vpop.f32.mrf.mxu0
        %1132 = vdwg.mxu0
        %1133 = vst.msk [vmem:[#allocation3] sm:$0xff] %vm599, %v1095
        %1134 = vst.msk [vmem:[#allocation3 + $0x8] sm:$0xff] %vm599, %v1100
        %1135 = vst.msk [vmem:[#allocation3 + $0x10] sm:$0xff] %vm599, %v1105
        %1136 = vst.msk [vmem:[#allocation3 + $0x18] sm:$0xff] %vm599, %v1110
        %1137 = vst.msk [vmem:[#allocation3 + $0x20] sm:$0xff] %vm599, %v1115
        %1138 = vst.msk [vmem:[#allocation3 + $0x28] sm:$0xff] %vm599, %v1120
        %1139 = vst.msk [vmem:[#allocation3 + $0x30] sm:$0xff] %vm599, %v1125
        %1140 = vst.msk [vmem:[#allocation3 + $0x38] sm:$0xff] %vm599, %v1130
        %v1141 = vld [vmem:[#allocation2] sm:$0xff]
        %v1142 = vld [vmem:[#allocation2 + $0x8] sm:$0xff]
        %v1143 = vld [vmem:[#allocation2 + $0x10] sm:$0xff]
        %v1144 = vld [vmem:[#allocation2 + $0x18] sm:$0xff]
        %v1145 = vld [vmem:[#allocation2 + $0x20] sm:$0xff]
        %v1146 = vld [vmem:[#allocation2 + $0x28] sm:$0xff]
        %s1147 = scalar_lea.vmem %s557, 16
        %v1148 = vld [vmem:[%s1147] sm:$0xff]
        %1149 = vmatprep.subr.mxu0 0.0
        %1150 = vmatpush1.msra.mxu0 0.0
        %1151 = vmatprep.subr.mxu0 0.0
        %1152 = vmatpush1.msra.mxu0 0.0
        %1153 = vmatprep.subr.mxu0 0.0
        %1154 = vmatpush1.msra.mxu0 0.0
        %1155 = vmatprep.subr.mxu0 0.0
        %1156 = vmatpush1.msra.mxu0 0.0
        %1157 = vmatprep.subr.mxu0 0.0
        %1158 = vmatpush1.msra.mxu0 0.0
        %1159 = vmatprep.subr.mxu0 0.0
        %1160 = vmatpush1.msra.mxu0 0.0
        %1161 = vmatprep.subr.mxu0 0.0
        %1162 = vmatpush1.msra.mxu0 0.0
        %1163 = vmatprep.subr.mxu0 0.0
        %1164 = vmatpush1.msra.mxu0 0.0
        %1165 = vmatprep.subr.mxu0 0.0
        %1166 = vmatpush1.msra.mxu0 0.0
        %1167 = vmatprep.subr.mxu0 0.0
        %1168 = vmatpush1.msra.mxu0 0.0
        %1169 = vmatprep.subr.mxu0 0.0
        %1170 = vmatpush1.msra.mxu0 0.0
        %1171 = vmatprep.subr.mxu0 0.0
        %1172 = vmatpush1.msra.mxu0 0.0
        %1173 = vmatprep.subr.mxu0 0.0
        %1174 = vmatpush1.msra.mxu0 0.0
        %1175 = vmatprep.subr.mxu0 0.0
        %1176 = vmatpush1.msra.mxu0 0.0
        %1177 = vmatprep.subr.mxu0 0.0
        %1178 = vmatpush1.msra.mxu0 0.0
        %1179 = vmatprep.subr.mxu0 0.0
        %1180 = vmatpush1.msra.mxu0 %v1148
        %1181 = vmatprep.subr.mxu0 0.0
        %1182 = vmatpush2.msra.mxu0 0.0
        %1183 = vmatprep.subr.mxu0 0.0
        %1184 = vmatpush2.msra.mxu0 0.0
        %1185 = vmatprep.subr.mxu0 0.0
        %1186 = vmatpush2.msra.mxu0 0.0
        %1187 = vmatprep.subr.mxu0 0.0
        %1188 = vmatpush2.msra.mxu0 0.0
        %1189 = vmatprep.subr.mxu0 0.0
        %1190 = vmatpush2.msra.mxu0 0.0
        %1191 = vmatprep.subr.mxu0 0.0
        %1192 = vmatpush2.msra.mxu0 0.0
        %1193 = vmatprep.subr.mxu0 0.0
        %1194 = vmatpush2.msra.mxu0 0.0
        %1195 = vmatprep.subr.mxu0 0.0
        %1196 = vmatpush2.msra.mxu0 0.0
        %1197 = vmatprep.subr.mxu0 0.0
        %1198 = vmatpush2.msra.mxu0 0.0
        %1199 = vmatprep.subr.mxu0 0.0
        %1200 = vmatpush2.msra.mxu0 0.0
        %1201 = vmatprep.subr.mxu0 0.0
        %1202 = vmatpush2.msra.mxu0 0.0
        %1203 = vmatprep.subr.mxu0 0.0
        %1204 = vmatpush2.msra.mxu0 0.0
        %1205 = vmatprep.subr.mxu0 0.0
        %1206 = vmatpush2.msra.mxu0 0.0
        %1207 = vmatprep.subr.mxu0 0.0
        %1208 = vmatpush2.msra.mxu0 0.0
        %1209 = vmatprep.subr.mxu0 0.0
        %1210 = vmatpush2.msra.mxu0 0.0
        %1211 = vmatprep.subr.mxu0 0.0
        %1212 = vmatpush2.msra.mxu0 0.0
        %1213 = vmatprep.mubr.f32.mxu0 0.0
        %1214 = vmatmul.mubr.f32.gmra.mxu0 %v736
        %v1215 = vpop.f32.mrf.mxu0
        %v1216 = vadd.f32 0.0, %v1215
        %v1217 = vpop.f32.mrf.mxu0
        %1218 = vmatprep.mubr.f32.mxu0 0.0
        %1219 = vmatmul.mubr.f32.gmra.mxu0 %v739
        %v1220 = vpop.f32.mrf.mxu0
        %v1221 = vadd.f32 0.0, %v1220
        %v1222 = vpop.f32.mrf.mxu0
        %1223 = vmatprep.mubr.f32.mxu0 0.0
        %1224 = vmatmul.mubr.f32.gmra.mxu0 %v742
        %v1225 = vpop.f32.mrf.mxu0
        %v1226 = vadd.f32 0.0, %v1225
        %v1227 = vpop.f32.mrf.mxu0
        %1228 = vmatprep.mubr.f32.mxu0 0.0
        %1229 = vmatmul.mubr.f32.gmra.mxu0 %v745
        %v1230 = vpop.f32.mrf.mxu0
        %v1231 = vadd.f32 0.0, %v1230
        %v1232 = vpop.f32.mrf.mxu0
        %1233 = vmatprep.mubr.f32.mxu0 0.0
        %1234 = vmatmul.mubr.f32.gmra.mxu0 %v748
        %v1235 = vpop.f32.mrf.mxu0
        %v1236 = vadd.f32 0.0, %v1235
        %v1237 = vpop.f32.mrf.mxu0
        %1238 = vmatprep.mubr.f32.mxu0 0.0
        %1239 = vmatmul.mubr.f32.gmra.mxu0 %v751
        %v1240 = vpop.f32.mrf.mxu0
        %v1241 = vadd.f32 0.0, %v1240
        %v1242 = vpop.f32.mrf.mxu0
        %1243 = vdwg.mxu0
        %v1244 = vadd.f32 %v1141, %v1216
        %v1245 = vadd.f32 %v1142, %v1221
        %v1246 = vadd.f32 %v1143, %v1226
        %v1247 = vadd.f32 %v1144, %v1231
        %v1248 = vadd.f32 %v1145, %v1236
        %v1249 = vadd.f32 %v1146, %v1241
        %1250 = vst.msk [vmem:[#allocation2] sm:$0xff] %vm599, %v1244
        %1251 = vst.msk [vmem:[#allocation2 + $0x8] sm:$0xff] %vm599, %v1245
        %1252 = vst.msk [vmem:[#allocation2 + $0x10] sm:$0xff] %vm599, %v1246
        %1253 = vst.msk [vmem:[#allocation2 + $0x18] sm:$0xff] %vm599, %v1247
        %1254 = vst.msk [vmem:[#allocation2 + $0x20] sm:$0xff] %vm599, %v1248
        %1255 = vst.msk [vmem:[#allocation2 + $0x28] sm:$0xff] %vm599, %v1249
        %v1256 = vld [vmem:[#allocation3] sm:$0xff]
        %v1257 = vld [vmem:[#allocation3 + $0x8] sm:$0xff]
        %v1258 = vld [vmem:[#allocation3 + $0x10] sm:$0xff]
        %v1259 = vld [vmem:[#allocation3 + $0x18] sm:$0xff]
        %v1260 = vld [vmem:[#allocation3 + $0x20] sm:$0xff]
        %v1261 = vld [vmem:[#allocation3 + $0x28] sm:$0xff]
        %s1262 = scalar_lea.vmem %s561, 8
        %v1263 = vld [vmem:[%s1262] sm:$0xf]
        %v1265 = vsel %vm900, %v1263, 0
        %1267 = vmatprep.subr.mxu0 0.0
        %1268 = vmatpush1.msra.mxu0 0.0
        %1269 = vmatprep.subr.mxu0 0.0
        %1270 = vmatpush1.msra.mxu0 0.0
        %1271 = vmatprep.subr.mxu0 0.0
        %1272 = vmatpush1.msra.mxu0 0.0
        %1273 = vmatprep.subr.mxu0 0.0
        %1274 = vmatpush1.msra.mxu0 0.0
        %1275 = vmatprep.subr.mxu0 0.0
        %1276 = vmatpush1.msra.mxu0 0.0
        %1277 = vmatprep.subr.mxu0 0.0
        %1278 = vmatpush1.msra.mxu0 0.0
        %1279 = vmatprep.subr.mxu0 0.0
        %1280 = vmatpush1.msra.mxu0 0.0
        %1281 = vmatprep.subr.mxu0 0.0
        %1282 = vmatpush1.msra.mxu0 0.0
        %1283 = vmatprep.subr.mxu0 0.0
        %1284 = vmatpush1.msra.mxu0 0.0
        %1285 = vmatprep.subr.mxu0 0.0
        %1286 = vmatpush1.msra.mxu0 0.0
        %1287 = vmatprep.subr.mxu0 0.0
        %1288 = vmatpush1.msra.mxu0 0.0
        %1289 = vmatprep.subr.mxu0 0.0
        %1290 = vmatpush1.msra.mxu0 0.0
        %1291 = vmatprep.subr.mxu0 0.0
        %1292 = vmatpush1.msra.mxu0 0.0
        %1293 = vmatprep.subr.mxu0 0.0
        %1294 = vmatpush1.msra.mxu0 0.0
        %1295 = vmatprep.subr.mxu0 0.0
        %1296 = vmatpush1.msra.mxu0 0.0
        %1297 = vmatprep.subr.mxu0 0.0
        %1298 = vmatpush1.msra.mxu0 %v1265
        %1299 = vmatprep.subr.mxu0 0.0
        %1300 = vmatpush2.msra.mxu0 0.0
        %1301 = vmatprep.subr.mxu0 0.0
        %1302 = vmatpush2.msra.mxu0 0.0
        %1303 = vmatprep.subr.mxu0 0.0
        %1304 = vmatpush2.msra.mxu0 0.0
        %1305 = vmatprep.subr.mxu0 0.0
        %1306 = vmatpush2.msra.mxu0 0.0
        %1307 = vmatprep.subr.mxu0 0.0
        %1308 = vmatpush2.msra.mxu0 0.0
        %1309 = vmatprep.subr.mxu0 0.0
        %1310 = vmatpush2.msra.mxu0 0.0
        %1311 = vmatprep.subr.mxu0 0.0
        %1312 = vmatpush2.msra.mxu0 0.0
        %1313 = vmatprep.subr.mxu0 0.0
        %1314 = vmatpush2.msra.mxu0 0.0
        %1315 = vmatprep.subr.mxu0 0.0
        %1316 = vmatpush2.msra.mxu0 0.0
        %1317 = vmatprep.subr.mxu0 0.0
        %1318 = vmatpush2.msra.mxu0 0.0
        %1319 = vmatprep.subr.mxu0 0.0
        %1320 = vmatpush2.msra.mxu0 0.0
        %1321 = vmatprep.subr.mxu0 0.0
        %1322 = vmatpush2.msra.mxu0 0.0
        %1323 = vmatprep.subr.mxu0 0.0
        %1324 = vmatpush2.msra.mxu0 0.0
        %1325 = vmatprep.subr.mxu0 0.0
        %1326 = vmatpush2.msra.mxu0 0.0
        %1327 = vmatprep.subr.mxu0 0.0
        %1328 = vmatpush2.msra.mxu0 0.0
        %1329 = vmatprep.subr.mxu0 0.0
        %1330 = vmatpush2.msra.mxu0 0.0
        %1331 = vmatprep.mubr.f32.mxu0 0.0
        %1332 = vmatmul.mubr.f32.gmra.mxu0 %v1013
        %v1333 = vpop.f32.mrf.mxu0
        %v1334 = vadd.f32 0.0, %v1333
        %v1335 = vpop.f32.mrf.mxu0
        %1336 = vmatprep.mubr.f32.mxu0 0.0
        %1337 = vmatmul.mubr.f32.gmra.mxu0 %v1015
        %v1338 = vpop.f32.mrf.mxu0
        %v1339 = vadd.f32 0.0, %v1338
        %v1340 = vpop.f32.mrf.mxu0
        %1341 = vmatprep.mubr.f32.mxu0 0.0
        %1342 = vmatmul.mubr.f32.gmra.mxu0 %v1017
        %v1343 = vpop.f32.mrf.mxu0
        %v1344 = vadd.f32 0.0, %v1343
        %v1345 = vpop.f32.mrf.mxu0
        %1346 = vmatprep.mubr.f32.mxu0 0.0
        %1347 = vmatmul.mubr.f32.gmra.mxu0 %v1019
        %v1348 = vpop.f32.mrf.mxu0
        %v1349 = vadd.f32 0.0, %v1348
        %v1350 = vpop.f32.mrf.mxu0
        %1351 = vmatprep.mubr.f32.mxu0 0.0
        %1352 = vmatmul.mubr.f32.gmra.mxu0 %v1021
        %v1353 = vpop.f32.mrf.mxu0
        %v1354 = vadd.f32 0.0, %v1353
        %v1355 = vpop.f32.mrf.mxu0
        %1356 = vmatprep.mubr.f32.mxu0 0.0
        %1357 = vmatmul.mubr.f32.gmra.mxu0 %v1023
        %v1358 = vpop.f32.mrf.mxu0
        %v1359 = vadd.f32 0.0, %v1358
        %v1360 = vpop.f32.mrf.mxu0
        %1361 = vdwg.mxu0
        %v1362 = vadd.f32 %v1256, %v1334
        %v1363 = vadd.f32 %v1257, %v1339
        %v1364 = vadd.f32 %v1258, %v1344
        %v1365 = vadd.f32 %v1259, %v1349
        %v1366 = vadd.f32 %v1260, %v1354
        %v1367 = vadd.f32 %v1261, %v1359
        %1368 = vst.msk [vmem:[#allocation3] sm:$0xff] %vm599, %v1362
        %1369 = vst.msk [vmem:[#allocation3 + $0x8] sm:$0xff] %vm599, %v1363
        %1370 = vst.msk [vmem:[#allocation3 + $0x10] sm:$0xff] %vm599, %v1364
        %1371 = vst.msk [vmem:[#allocation3 + $0x18] sm:$0xff] %vm599, %v1365
        %1372 = vst.msk [vmem:[#allocation3 + $0x20] sm:$0xff] %vm599, %v1366
        %1373 = vst.msk [vmem:[#allocation3 + $0x28] sm:$0xff] %vm599, %v1367
        %v1374 = vld [vmem:[%s499] sm:$0xff]
        %v1375 = vld [vmem:[%s499 + $0x8] sm:$0xff]
        %v1376 = vld [vmem:[#allocation2 + $0x30] sm:$0xff]
        %v1377 = vld [vmem:[#allocation2 + $0x38] sm:$0xff]
        %v1378 = vld [vmem:[%s1147] sm:$0xff]
        %v1380 = vsel %vm599, %v1374, 0
        %v1383 = vsel %vm599, %v1375, 0
        %1385 = vmatprep.subr.mxu0 0.0
        %1386 = vmatpush1.msra.mxu0 0.0
        %1387 = vmatprep.subr.mxu0 0.0
        %1388 = vmatpush1.msra.mxu0 0.0
        %1389 = vmatprep.subr.mxu0 0.0
        %1390 = vmatpush1.msra.mxu0 0.0
        %1391 = vmatprep.subr.mxu0 0.0
        %1392 = vmatpush1.msra.mxu0 0.0
        %1393 = vmatprep.subr.mxu0 0.0
        %1394 = vmatpush1.msra.mxu0 0.0
        %1395 = vmatprep.subr.mxu0 0.0
        %1396 = vmatpush1.msra.mxu0 0.0
        %1397 = vmatprep.subr.mxu0 0.0
        %1398 = vmatpush1.msra.mxu0 0.0
        %1399 = vmatprep.subr.mxu0 0.0
        %1400 = vmatpush1.msra.mxu0 0.0
        %1401 = vmatprep.subr.mxu0 0.0
        %1402 = vmatpush1.msra.mxu0 0.0
        %1403 = vmatprep.subr.mxu0 0.0
        %1404 = vmatpush1.msra.mxu0 0.0
        %1405 = vmatprep.subr.mxu0 0.0
        %1406 = vmatpush1.msra.mxu0 0.0
        %1407 = vmatprep.subr.mxu0 0.0
        %1408 = vmatpush1.msra.mxu0 0.0
        %1409 = vmatprep.subr.mxu0 0.0
        %1410 = vmatpush1.msra.mxu0 0.0
        %1411 = vmatprep.subr.mxu0 0.0
        %1412 = vmatpush1.msra.mxu0 0.0
        %1413 = vmatprep.subr.mxu0 0.0
        %1414 = vmatpush1.msra.mxu0 0.0
        %1415 = vmatprep.subr.mxu0 0.0
        %1416 = vmatpush1.msra.mxu0 %v1378
        %1417 = vmatprep.subr.mxu0 0.0
        %1418 = vmatpush2.msra.mxu0 0.0
        %1419 = vmatprep.subr.mxu0 0.0
        %1420 = vmatpush2.msra.mxu0 0.0
        %1421 = vmatprep.subr.mxu0 0.0
        %1422 = vmatpush2.msra.mxu0 0.0
        %1423 = vmatprep.subr.mxu0 0.0
        %1424 = vmatpush2.msra.mxu0 0.0
        %1425 = vmatprep.subr.mxu0 0.0
        %1426 = vmatpush2.msra.mxu0 0.0
        %1427 = vmatprep.subr.mxu0 0.0
        %1428 = vmatpush2.msra.mxu0 0.0
        %1429 = vmatprep.subr.mxu0 0.0
        %1430 = vmatpush2.msra.mxu0 0.0
        %1431 = vmatprep.subr.mxu0 0.0
        %1432 = vmatpush2.msra.mxu0 0.0
        %1433 = vmatprep.subr.mxu0 0.0
        %1434 = vmatpush2.msra.mxu0 0.0
        %1435 = vmatprep.subr.mxu0 0.0
        %1436 = vmatpush2.msra.mxu0 0.0
        %1437 = vmatprep.subr.mxu0 0.0
        %1438 = vmatpush2.msra.mxu0 0.0
        %1439 = vmatprep.subr.mxu0 0.0
        %1440 = vmatpush2.msra.mxu0 0.0
        %1441 = vmatprep.subr.mxu0 0.0
        %1442 = vmatpush2.msra.mxu0 0.0
        %1443 = vmatprep.subr.mxu0 0.0
        %1444 = vmatpush2.msra.mxu0 0.0
        %1445 = vmatprep.subr.mxu0 0.0
        %1446 = vmatpush2.msra.mxu0 0.0
        %1447 = vmatprep.subr.mxu0 0.0
        %1448 = vmatpush2.msra.mxu0 0.0
        %1449 = vmatprep.mubr.f32.mxu0 0.0
        %1450 = vmatmul.mubr.f32.gmra.mxu0 %v1380
        %v1451 = vpop.f32.mrf.mxu0
        %v1452 = vadd.f32 0.0, %v1451
        %v1453 = vpop.f32.mrf.mxu0
        %1454 = vmatprep.mubr.f32.mxu0 0.0
        %1455 = vmatmul.mubr.f32.gmra.mxu0 %v1383
        %v1456 = vpop.f32.mrf.mxu0
        %v1457 = vadd.f32 0.0, %v1456
        %v1458 = vpop.f32.mrf.mxu0
        %1459 = vdwg.mxu0
        %v1460 = vadd.f32 %v1376, %v1452
        %v1461 = vadd.f32 %v1377, %v1457
        %1462 = vst.msk [vmem:[#allocation2 + $0x30] sm:$0xff] %vm599, %v1460
        %1463 = vst.msk [vmem:[#allocation2 + $0x38] sm:$0xff] %vm599, %v1461
        %v1464 = vld [vmem:[#allocation3 + $0x30] sm:$0xff]
        %v1465 = vld [vmem:[#allocation3 + $0x38] sm:$0xff]
        %v1466 = vld [vmem:[%s1262] sm:$0xf]
        %v1467 = vsel %vm883, %v1374, 0
        %v1469 = vsel %vm883, %v1375, 0
        %v1472 = vsel %vm900, %v1466, 0
        %1474 = vmatprep.subr.mxu0 0.0
        %1475 = vmatpush1.msra.mxu0 0.0
        %1476 = vmatprep.subr.mxu0 0.0
        %1477 = vmatpush1.msra.mxu0 0.0
        %1478 = vmatprep.subr.mxu0 0.0
        %1479 = vmatpush1.msra.mxu0 0.0
        %1480 = vmatprep.subr.mxu0 0.0
        %1481 = vmatpush1.msra.mxu0 0.0
        %1482 = vmatprep.subr.mxu0 0.0
        %1483 = vmatpush1.msra.mxu0 0.0
        %1484 = vmatprep.subr.mxu0 0.0
        %1485 = vmatpush1.msra.mxu0 0.0
        %1486 = vmatprep.subr.mxu0 0.0
        %1487 = vmatpush1.msra.mxu0 0.0
        %1488 = vmatprep.subr.mxu0 0.0
        %1489 = vmatpush1.msra.mxu0 0.0
        %1490 = vmatprep.subr.mxu0 0.0
        %1491 = vmatpush1.msra.mxu0 0.0
        %1492 = vmatprep.subr.mxu0 0.0
        %1493 = vmatpush1.msra.mxu0 0.0
        %1494 = vmatprep.subr.mxu0 0.0
        %1495 = vmatpush1.msra.mxu0 0.0
        %1496 = vmatprep.subr.mxu0 0.0
        %1497 = vmatpush1.msra.mxu0 0.0
        %1498 = vmatprep.subr.mxu0 0.0
        %1499 = vmatpush1.msra.mxu0 0.0
        %1500 = vmatprep.subr.mxu0 0.0
        %1501 = vmatpush1.msra.mxu0 0.0
        %1502 = vmatprep.subr.mxu0 0.0
        %1503 = vmatpush1.msra.mxu0 0.0
        %1504 = vmatprep.subr.mxu0 0.0
        %1505 = vmatpush1.msra.mxu0 %v1472
        %1506 = vmatprep.subr.mxu0 0.0
        %1507 = vmatpush2.msra.mxu0 0.0
        %1508 = vmatprep.subr.mxu0 0.0
        %1509 = vmatpush2.msra.mxu0 0.0
        %1510 = vmatprep.subr.mxu0 0.0
        %1511 = vmatpush2.msra.mxu0 0.0
        %1512 = vmatprep.subr.mxu0 0.0
        %1513 = vmatpush2.msra.mxu0 0.0
        %1514 = vmatprep.subr.mxu0 0.0
        %1515 = vmatpush2.msra.mxu0 0.0
        %1516 = vmatprep.subr.mxu0 0.0
        %1517 = vmatpush2.msra.mxu0 0.0
        %1518 = vmatprep.subr.mxu0 0.0
        %1519 = vmatpush2.msra.mxu0 0.0
        %1520 = vmatprep.subr.mxu0 0.0
        %1521 = vmatpush2.msra.mxu0 0.0
        %1522 = vmatprep.subr.mxu0 0.0
        %1523 = vmatpush2.msra.mxu0 0.0
        %1524 = vmatprep.subr.mxu0 0.0
        %1525 = vmatpush2.msra.mxu0 0.0
        %1526 = vmatprep.subr.mxu0 0.0
        %1527 = vmatpush2.msra.mxu0 0.0
        %1528 = vmatprep.subr.mxu0 0.0
        %1529 = vmatpush2.msra.mxu0 0.0
        %1530 = vmatprep.subr.mxu0 0.0
        %1531 = vmatpush2.msra.mxu0 0.0
        %1532 = vmatprep.subr.mxu0 0.0
        %1533 = vmatpush2.msra.mxu0 0.0
        %1534 = vmatprep.subr.mxu0 0.0
        %1535 = vmatpush2.msra.mxu0 0.0
        %1536 = vmatprep.subr.mxu0 0.0
        %1537 = vmatpush2.msra.mxu0 0.0
        %1538 = vmatprep.mubr.f32.mxu0 0.0
        %1539 = vmatmul.mubr.f32.gmra.mxu0 %v1467
        %v1540 = vpop.f32.mrf.mxu0
        %v1541 = vadd.f32 0.0, %v1540
        %v1542 = vpop.f32.mrf.mxu0
        %1543 = vmatprep.mubr.f32.mxu0 0.0
        %1544 = vmatmul.mubr.f32.gmra.mxu0 %v1469
        %v1545 = vpop.f32.mrf.mxu0
        %v1546 = vadd.f32 0.0, %v1545
        %v1547 = vpop.f32.mrf.mxu0
        %1548 = vdwg.mxu0
        %v1549 = vadd.f32 %v1464, %v1541
        %v1550 = vadd.f32 %v1465, %v1546
        %1551 = vst.msk [vmem:[#allocation3 + $0x30] sm:$0xff] %vm599, %v1549
        %1552 = vst.msk [vmem:[#allocation3 + $0x38] sm:$0xff] %vm599, %v1550
        %v1553 = vld [vmem:[#allocation2] sm:$0xff]
        %v1554 = vld [vmem:[#allocation2 + $0x10] sm:$0xff]
        %v1555 = vld [vmem:[#allocation2 + $0x20] sm:$0xff]
        %v1556 = vld [vmem:[#allocation2 + $0x30] sm:$0xff]
        %v1557 = vld [vmem:[#allocation3] sm:$0xff]
        %v1558 = vld [vmem:[#allocation3 + $0x8] sm:$0xff]
        %v1559 = vld [vmem:[#allocation3 + $0x10] sm:$0xff]
        %v1560 = vld [vmem:[#allocation3 + $0x18] sm:$0xff]
        %v1561 = vld [vmem:[#allocation3 + $0x20] sm:$0xff]
        %v1562 = vld [vmem:[#allocation3 + $0x28] sm:$0xff]
        %v1563 = vld [vmem:[#allocation3 + $0x30] sm:$0xff]
        %v1564 = vld [vmem:[#allocation3 + $0x38] sm:$0xff]
        %vm1573 = vcmask 1046528
        %v1574 = vrot.slane %v1557, 1
        %v1575 = vrot.slane %v1558, 1
        %v1576 = vsel %vm1573, %v1574, %v1575
        %v1577 = vrot.slane %v1559, 1
        %v1578 = vrot.slane %v1560, 1
        %v1579 = vsel %vm1573, %v1577, %v1578
        %v1580 = vrot.slane %v1561, 1
        %v1581 = vrot.slane %v1562, 1
        %v1582 = vsel %vm1573, %v1580, %v1581
        %v1583 = vrot.slane %v1563, 1
        %v1584 = vrot.slane %v1564, 1
        %v1585 = vsel %vm1573, %v1583, %v1584
        %v1590 = vadd.f32 %v1553, %v1576
        %v1591 = vadd.f32 %v1554, %v1579
        %v1592 = vadd.f32 %v1555, %v1582
        %v1593 = vadd.f32 %v1556, %v1585
        %1594 = vst.msk [vmem:[%s576] sm:$0xff] %vm599, %v1590
        %1595 = vst.msk [vmem:[%s576 + $0x8] sm:$0xff] %vm599, %v1591
        %1596 = vst.msk [vmem:[%s576 + $0x10] sm:$0xff] %vm599, %v1592
        %1597 = vst.msk [vmem:[%s576 + $0x18] sm:$0xff] %vm599, %v1593
        %s1598 = smul.u32 4, %s23
        %p1599 = scmp.lt.s32.totalorder %s21, 1
        %s1600 = scalar_select %p1599, %s21, 1
        %p1601 = scmp.lt.s32.totalorder %s1598, 7
        %s1602 = scalar_select %p1601, %s1598, 7
        %p1603 = scmp.lt.s32.totalorder %s22, 0
        %s1604 = scalar_select %p1603, %s22, 0
        %s1605 = sadd.s32 %s1604, %s1602
        %s1606 = smul.addr %s1600, 8
        %s1607 = sadd.s32 %s1605, %s1606
        %s1608 = smul.addr %s1607, 8
        %s1609 = scalar_lea.vmem %s5, %s1608
        // Predicated region
        $region131: #{_conv3x3_stride2_impl.1} parent=121 // pred_check
          %p1610 = pneg %p195
        $region132: #{_conv3x3_stride2_impl.1} parent=121 // pred_check_branch
          %1612 = sbr.rel (%p1610) target = $region134
        $region133: #{_conv3x3_stride2_impl.1} parent=121 // pred_region
          %s1613 = smul.u32 4, %s23
        $region134: #{_conv3x3_stride2_impl.1} parent=121 // pred_fallthru
          _
      $region122: #{_conv3x3_stride2_impl.1} parent=5 // pred_fallthru
        _
      %p1614 = scmp.le.s32.totalorder 2, %s11
      // Predicated region
      $region135: #{_conv3x3_stride2_impl.1} parent=5 // pred_check
        %p1615 = pneg %p1614
      $region136: #{_conv3x3_stride2_impl.1} parent=5 // pred_check_branch
        %1617 = sbr.rel (%p1615) target = $region138
      $region137: #{_conv3x3_stride2_impl.1} parent=5 // pred_region
        %s1618 = ssub.s32 %s11, 2
        // Predicated region
        $region139: #{_conv3x3_stride2_impl.1} parent=137 // pred_check
          %p1619 = pneg %p201
        $region140: #{_conv3x3_stride2_impl.1} parent=137 // pred_check_branch
          %1621 = sbr.rel (%p1619) target = $region142
        $region141: #{_conv3x3_stride2_impl.1} parent=137 // pred_region
          %s1622 = smul.u32 4, %s26
          %p1623 = scmp.lt.s32.totalorder %s24, 1
          %s1624 = scalar_select %p1623, %s24, 1
          %p1625 = scmp.lt.s32.totalorder %s1622, 7
          %s1626 = scalar_select %p1625, %s1622, 7
          %p1627 = scmp.lt.s32.totalorder %s25, 0
          %s1628 = scalar_select %p1627, %s25, 0
          %s1629 = sadd.s32 %s1628, %s1626
          %s1630 = smul.addr %s1624, 8
          %s1631 = sadd.s32 %s1629, %s1630
          %s1632 = smul.addr %s1631, 8
          %s1633 = scalar_lea.vmem %s5, %s1632
        $region142: #{_conv3x3_stride2_impl.1} parent=137 // pred_fallthru
          _
      $region138: #{_conv3x3_stride2_impl.1} parent=5 // pred_fallthru
        _
    $region6: #{_conv3x3_stride2_impl.1} parent=1 // loop_footer
      %s15 = sadd.s32 1, %s11
    $region7: #{_conv3x3_stride2_impl.1} parent=1 // loop_footer_branch
      %10 = sbr.rel target = $region3
    $region8: #{_conv3x3_stride2_impl.1} parent=1 // loop_exit
      _

</llo_original>
